<compile_context>
chip_gen: v7x
topology: tpu7x:2x2x1
jax: 0.10.0
libtpu: 0.0.40
codegen_flags: <defaults>
</compile_context>

<pallas_src>
import functools

import jax
import jax.numpy as jnp
from jax import lax
from jax.experimental import pallas as pl
from jax.experimental.pallas import tpu as pltpu

BN_EPS = 1e-5

D_IN = 512       # fen_model input/output width
D_CAT = 1024     # concat width
D_FC1 = 256      # fc1 output width
N_OUT_PAD = 8    # fc_a/fc_b stacked (2 real heads) padded to 8 columns


# ----------------------------------------------------------------------------
# Kernel: natural batch-on-sublanes layout; activations are (TILE_N, features).
# All matmuls are bf16 x bf16 -> f32 accumulate; bias + ReLU in f32.
# ----------------------------------------------------------------------------
def critic_kernel(xa_ref, xb_ref,
                  wfa_ref, bfa_ref, wfb_ref, bfb_ref,
                  w1a_ref, w1b_ref, b1_ref,
                  wab_ref, bab_ref,
                  out_ref):
    # fen_model approximation (eval BN folded into the Linear): Linear + ReLU.
    ha = jnp.dot(xa_ref[...], wfa_ref[...], preferred_element_type=jnp.float32)
    ha = jnp.maximum(ha + bfa_ref[...], 0.0).astype(jnp.bfloat16)   # (TN, 512)
    hb = jnp.dot(xb_ref[...], wfb_ref[...], preferred_element_type=jnp.float32)
    hb = jnp.maximum(hb + bfb_ref[...], 0.0).astype(jnp.bfloat16)   # (TN, 512)

    # fc1 over concat([ha, hb], axis=1) expressed as two matmuls on split
    # weights (no in-kernel concat copy).
    h = jnp.dot(ha, w1a_ref[...], preferred_element_type=jnp.float32)
    h = h + jnp.dot(hb, w1b_ref[...], preferred_element_type=jnp.float32)
    h = jnp.maximum(h + b1_ref[...], 0.0).astype(jnp.bfloat16)      # (TN, 256)
    # Dropout(p=0.3) is identity in eval mode.

    # fc_a / fc_b stacked into one (256, 8) matmul (cols 2..7 are zero pad).
    out_ref[...] = (
        jnp.dot(h, wab_ref[...], preferred_element_type=jnp.float32)
        + bab_ref[...]
    )                                                                # (TN, 8)


# ----------------------------------------------------------------------------
# Parameter handling
# ----------------------------------------------------------------------------
def _fold_linear_bn(w, b, bn_params):
    """Fold eval-mode BatchNorm following a Linear into the Linear itself."""
    gamma, beta, mean, var = bn_params
    s = gamma * lax.rsqrt(var + BN_EPS)          # (out,)
    return w * s[None, :], (b - mean) * s + beta


def prepare_kernel_params(p):
    """Fold BN, split fc1, stack/pad fc_a/fc_b, cast weights to bf16."""
    bf16 = jnp.bfloat16
    wfa, bfa = _fold_linear_bn(p["wfa"], p["bfa"], p["bna"])
    wfb, bfb = _fold_linear_bn(p["wfb"], p["bfb"], p["bnb"])
    w1a = p["w1"][:D_IN, :]                                   # (512, 256)
    w1b = p["w1"][D_IN:, :]                                   # (512, 256)
    wab = jnp.concatenate(
        [p["wa"], p["wb"], jnp.zeros((D_FC1, N_OUT_PAD - 2), jnp.float32)],
        axis=1)                                               # (256, 8)
    bab = jnp.concatenate(
        [p["ba"], p["bb"], jnp.zeros((N_OUT_PAD - 2,), jnp.float32)])
    return (
        wfa.astype(bf16), bfa.reshape(1, D_IN).astype(jnp.float32),
        wfb.astype(bf16), bfb.reshape(1, D_IN).astype(jnp.float32),
        w1a.astype(bf16), w1b.astype(bf16),
        p["b1"].reshape(1, D_FC1).astype(jnp.float32),
        wab.astype(bf16), bab.reshape(1, N_OUT_PAD).astype(jnp.float32),
    )


def init_params(key):
    ks = jax.random.split(key, 7)

    def linear(k, fan_in, fan_out):
        bound = 1.0 / jnp.sqrt(fan_in)
        kw, kb = jax.random.split(k)
        w = jax.random.uniform(kw, (fan_in, fan_out), jnp.float32, -bound, bound)
        b = jax.random.uniform(kb, (fan_out,), jnp.float32, -bound, bound)
        return w, b

    def bn(k, feats):
        kg, kb, km, kv = jax.random.split(k, 4)
        gamma = 1.0 + 0.1 * jax.random.normal(kg, (feats,), jnp.float32)
        beta = 0.1 * jax.random.normal(kb, (feats,), jnp.float32)
        mean = 0.1 * jax.random.normal(km, (feats,), jnp.float32)
        var = 1.0 + 0.1 * jax.random.uniform(kv, (feats,), jnp.float32)
        return gamma, beta, mean, var

    wfa, bfa = linear(ks[0], D_IN, D_IN)
    bna = bn(ks[1], D_IN)
    wfb, bfb = linear(ks[2], D_IN, D_IN)
    bnb = bn(ks[3], D_IN)
    w1, b1 = linear(ks[4], D_CAT, D_FC1)
    wa, ba = linear(ks[5], D_FC1, 1)
    wb, bb = linear(ks[6], D_FC1, 1)
    return dict(wfa=wfa, bfa=bfa, bna=bna, wfb=wfb, bfb=bfb, bnb=bnb,
                w1=w1, b1=b1, wa=wa, ba=ba, wb=wb, bb=bb)


# ----------------------------------------------------------------------------
# Wrapper
# ----------------------------------------------------------------------------
def _round_up(x, m):
    return ((x + m - 1) // m) * m


def critic_forward(image_a, image_b, raw_params, *, block_n=1024):
    """image_a, image_b: (N, 512). Returns (out_a, out_b), each (N, 1) f32."""
    n = image_a.shape[0]

    # Clamp the batch tile for small batches (don't compute on pure padding),
    # and prefer >= 2 grid steps so both v7x TensorCores get work.
    bn = min(block_n, _round_up(n, 16))
    if _round_up(n, bn) // bn < 2 and n > 16:
        bn = max(16, _round_up((n + 1) // 2, 16))
    n_pad = _round_up(n, bn)

    kparams = prepare_kernel_params(raw_params)

    # Natural layout (batch on sublanes): only a dtype cast + batch pad, no
    # transpose/relayout pass over the inputs.
    xa = image_a.astype(jnp.bfloat16)
    xb = image_b.astype(jnp.bfloat16)
    if n_pad != n:
        xa = jnp.pad(xa, ((0, n_pad - n), (0, 0)))
        xb = jnp.pad(xb, ((0, n_pad - n), (0, 0)))

    x_spec = pl.BlockSpec((bn, D_IN), lambda i: (i, 0))

    def resident(arr):
        # Full array with a constant block index -> stays in VMEM across steps.
        return pl.BlockSpec(arr.shape, lambda i: (0, 0))

    flops = int(2 * n_pad * (2 * D_IN * D_IN + D_CAT * D_FC1 + D_FC1 * N_OUT_PAD))
    param_bytes = sum(int(p.size) * p.dtype.itemsize for p in kparams)
    bytes_accessed = int(2 * (2 * D_IN * n_pad)            # bf16 inputs
                         + 4 * N_OUT_PAD * n_pad           # f32 output
                         + param_bytes)

    out = pl.pallas_call(
        critic_kernel,
        out_shape=jax.ShapeDtypeStruct((n_pad, N_OUT_PAD), jnp.float32),
        grid=(n_pad // bn,),
        in_specs=[x_spec, x_spec] + [resident(w) for w in kparams],
        out_specs=pl.BlockSpec((bn, N_OUT_PAD), lambda i: (i, 0)),
        compiler_params=pltpu.CompilerParams(
            dimension_semantics=("parallel",),
            vmem_limit_bytes=40 * 1024 * 1024,
        ),
        cost_estimate=pl.CostEstimate(
            flops=flops, transcendentals=0, bytes_accessed=bytes_accessed),
    )(xa, xb, *kparams)

    out_a = out[:n, 0:1]
    out_b = out[:n, 1:2]
    return out_a, out_b


# ----------------------------------------------------------------------------
# Plain-JAX reference (unfolded BN, f32, standard layout) for correctness.
# ----------------------------------------------------------------------------
def _bn_eval(h, bn_params):
    gamma, beta, mean, var = bn_params
    return (h - mean) * lax.rsqrt(var + BN_EPS) * gamma + beta


def reference_forward(image_a, image_b, p):
    ha = jnp.maximum(_bn_eval(image_a @ p["wfa"] + p["bfa"], p["bna"]), 0.0)
    hb = jnp.maximum(_bn_eval(image_b @ p["wfb"] + p["bfb"], p["bnb"]), 0.0)
    feat = jnp.concatenate([ha, hb], axis=1)
    h = jnp.maximum(feat @ p["w1"] + p["b1"], 0.0)
    out_a = h @ p["wa"] + p["ba"]
    out_b = h @ p["wb"] + p["bb"]
    return out_a, out_b


if __name__ == "__main__":
    batch = 8
    key = jax.random.PRNGKey(0)
    ka, kb, kp = jax.random.split(key, 3)
    image_a = jax.random.normal(ka, (batch, D_IN), jnp.float32)
    image_b = jax.random.normal(kb, (batch, D_IN), jnp.float32)
    params = init_params(kp)

    out_a, out_b = critic_forward(image_a, image_b, params)
    out_a, out_b = jax.block_until_ready((out_a, out_b))

    ref_a, ref_b = reference_forward(image_a, image_b, params)
    assert out_a.shape == (batch, 1) and out_b.shape == (batch, 1)
    # bf16 weights/activations vs f32 reference -> loosened tolerance.
    assert jnp.allclose(out_a, ref_a, atol=2.5e-2, rtol=2.5e-2), \
        float(jnp.max(jnp.abs(out_a - ref_a)))
    assert jnp.allclose(out_b, ref_b, atol=2.5e-2, rtol=2.5e-2), \
        float(jnp.max(jnp.abs(out_b - ref_b)))

    print("KERNEL_OK")
</pallas_src>

<mosaic_0001>
module attributes {stable_mosaic.version = 11 : i64} {
  func.func @critic_kernel(%arg0: i32, %arg1: memref<16x512xbf16, #tpu.memory_space<vmem>>, %arg2: memref<16x512xbf16, #tpu.memory_space<vmem>>, %arg3: memref<512x512xbf16, #tpu.memory_space<vmem>>, %arg4: memref<1x512xf32, #tpu.memory_space<vmem>>, %arg5: memref<512x512xbf16, #tpu.memory_space<vmem>>, %arg6: memref<1x512xf32, #tpu.memory_space<vmem>>, %arg7: memref<512x256xbf16, #tpu.memory_space<vmem>>, %arg8: memref<512x256xbf16, #tpu.memory_space<vmem>>, %arg9: memref<1x256xf32, #tpu.memory_space<vmem>>, %arg10: memref<256x8xbf16, #tpu.memory_space<vmem>>, %arg11: memref<1x8xf32, #tpu.memory_space<vmem>>, %arg12: memref<16x8xf32, #tpu.memory_space<vmem>>) attributes {dimension_semantics = [#tpu.dimension_semantics<parallel>], iteration_bounds = array<i64: 1>, scalar_prefetch = 0 : i64, scratch_operands = 0 : i64, tpu.core_type = #tpu.core_type<tc>, window_params = [{transform_indices = @transform_0, window_bounds = array<i64: 16, 512>}, {transform_indices = @transform_1, window_bounds = array<i64: 16, 512>}, {pipeline_mode = #tpu.pipeline_mode<synchronous>, transform_indices = @transform_2, window_bounds = array<i64: 512, 512>}, {pipeline_mode = #tpu.pipeline_mode<synchronous>, transform_indices = @transform_3, window_bounds = array<i64: 1, 512>}, {pipeline_mode = #tpu.pipeline_mode<synchronous>, transform_indices = @transform_4, window_bounds = array<i64: 512, 512>}, {pipeline_mode = #tpu.pipeline_mode<synchronous>, transform_indices = @transform_5, window_bounds = array<i64: 1, 512>}, {pipeline_mode = #tpu.pipeline_mode<synchronous>, transform_indices = @transform_6, window_bounds = array<i64: 512, 256>}, {pipeline_mode = #tpu.pipeline_mode<synchronous>, transform_indices = @transform_7, window_bounds = array<i64: 512, 256>}, {pipeline_mode = #tpu.pipeline_mode<synchronous>, transform_indices = @transform_8, window_bounds = array<i64: 1, 256>}, {pipeline_mode = #tpu.pipeline_mode<synchronous>, transform_indices = @transform_9, window_bounds = array<i64: 256, 8>}, {pipeline_mode = #tpu.pipeline_mode<synchronous>, transform_indices = @transform_10, window_bounds = array<i64: 1, 8>}, {transform_indices = @transform_11, window_bounds = array<i64: 16, 8>}]} {
    %c0 = arith.constant 0 : index
    %c0_0 = arith.constant 0 : index
    %0 = vector.load %arg1[%c0, %c0_0] : memref<16x512xbf16, #tpu.memory_space<vmem>>, vector<16x512xbf16>
    %c0_1 = arith.constant 0 : index
    %c0_2 = arith.constant 0 : index
    %1 = vector.load %arg3[%c0_1, %c0_2] : memref<512x512xbf16, #tpu.memory_space<vmem>>, vector<512x512xbf16>
    %cst = arith.constant dense<0.000000e+00> : vector<16x512xf32>
    %2 = tpu.matmul %0, %1, %cst {dimension_numbers = #tpu.dot_dimension_numbers<[1], [0], [0], [1], [0, 0, 1, 1], [], []>} : vector<16x512xbf16>, vector<512x512xbf16>, vector<16x512xf32> -> vector<16x512xf32>
    %c0_3 = arith.constant 0 : index
    %c0_4 = arith.constant 0 : index
    %3 = vector.load %arg4[%c0_3, %c0_4] : memref<1x512xf32, #tpu.memory_space<vmem>>, vector<1x512xf32>
    %4 = vector.broadcast %3 : vector<1x512xf32> to vector<16x512xf32>
    %5 = arith.addf %2, %4 : vector<16x512xf32>
    %cst_5 = arith.constant 0.000000e+00 : f32
    %6 = vector.broadcast %cst_5 : f32 to vector<16x512xf32>
    %7 = arith.maximumf %5, %6 : vector<16x512xf32>
    %8 = arith.truncf %7 : vector<16x512xf32> to vector<16x512xbf16>
    %c0_6 = arith.constant 0 : index
    %c0_7 = arith.constant 0 : index
    %9 = vector.load %arg2[%c0_6, %c0_7] : memref<16x512xbf16, #tpu.memory_space<vmem>>, vector<16x512xbf16>
    %c0_8 = arith.constant 0 : index
    %c0_9 = arith.constant 0 : index
    %10 = vector.load %arg5[%c0_8, %c0_9] : memref<512x512xbf16, #tpu.memory_space<vmem>>, vector<512x512xbf16>
    %cst_10 = arith.constant dense<0.000000e+00> : vector<16x512xf32>
    %11 = tpu.matmul %9, %10, %cst_10 {dimension_numbers = #tpu.dot_dimension_numbers<[1], [0], [0], [1], [0, 0, 1, 1], [], []>} : vector<16x512xbf16>, vector<512x512xbf16>, vector<16x512xf32> -> vector<16x512xf32>
    %c0_11 = arith.constant 0 : index
    %c0_12 = arith.constant 0 : index
    %12 = vector.load %arg6[%c0_11, %c0_12] : memref<1x512xf32, #tpu.memory_space<vmem>>, vector<1x512xf32>
    %13 = vector.broadcast %12 : vector<1x512xf32> to vector<16x512xf32>
    %14 = arith.addf %11, %13 : vector<16x512xf32>
    %cst_13 = arith.constant 0.000000e+00 : f32
    %15 = vector.broadcast %cst_13 : f32 to vector<16x512xf32>
    %16 = arith.maximumf %14, %15 : vector<16x512xf32>
    %17 = arith.truncf %16 : vector<16x512xf32> to vector<16x512xbf16>
    %c0_14 = arith.constant 0 : index
    %c0_15 = arith.constant 0 : index
    %18 = vector.load %arg7[%c0_14, %c0_15] : memref<512x256xbf16, #tpu.memory_space<vmem>>, vector<512x256xbf16>
    %cst_16 = arith.constant dense<0.000000e+00> : vector<16x256xf32>
    %19 = tpu.matmul %8, %18, %cst_16 {dimension_numbers = #tpu.dot_dimension_numbers<[1], [0], [0], [1], [0, 0, 1, 1], [], []>} : vector<16x512xbf16>, vector<512x256xbf16>, vector<16x256xf32> -> vector<16x256xf32>
    %c0_17 = arith.constant 0 : index
    %c0_18 = arith.constant 0 : index
    %20 = vector.load %arg8[%c0_17, %c0_18] : memref<512x256xbf16, #tpu.memory_space<vmem>>, vector<512x256xbf16>
    %cst_19 = arith.constant dense<0.000000e+00> : vector<16x256xf32>
    %21 = tpu.matmul %17, %20, %cst_19 {dimension_numbers = #tpu.dot_dimension_numbers<[1], [0], [0], [1], [0, 0, 1, 1], [], []>} : vector<16x512xbf16>, vector<512x256xbf16>, vector<16x256xf32> -> vector<16x256xf32>
    %22 = arith.addf %19, %21 : vector<16x256xf32>
    %c0_20 = arith.constant 0 : index
    %c0_21 = arith.constant 0 : index
    %23 = vector.load %arg9[%c0_20, %c0_21] : memref<1x256xf32, #tpu.memory_space<vmem>>, vector<1x256xf32>
    %24 = vector.broadcast %23 : vector<1x256xf32> to vector<16x256xf32>
    %25 = arith.addf %22, %24 : vector<16x256xf32>
    %cst_22 = arith.constant 0.000000e+00 : f32
    %26 = vector.broadcast %cst_22 : f32 to vector<16x256xf32>
    %27 = arith.maximumf %25, %26 : vector<16x256xf32>
    %28 = arith.truncf %27 : vector<16x256xf32> to vector<16x256xbf16>
    %c0_23 = arith.constant 0 : index
    %c0_24 = arith.constant 0 : index
    %29 = vector.load %arg10[%c0_23, %c0_24] : memref<256x8xbf16, #tpu.memory_space<vmem>>, vector<256x8xbf16>
    %cst_25 = arith.constant dense<0.000000e+00> : vector<16x8xf32>
    %30 = tpu.matmul %28, %29, %cst_25 {dimension_numbers = #tpu.dot_dimension_numbers<[1], [0], [0], [1], [0, 0, 1, 1], [], []>} : vector<16x256xbf16>, vector<256x8xbf16>, vector<16x8xf32> -> vector<16x8xf32>
    %c0_26 = arith.constant 0 : index
    %c0_27 = arith.constant 0 : index
    %31 = vector.load %arg11[%c0_26, %c0_27] : memref<1x8xf32, #tpu.memory_space<vmem>>, vector<1x8xf32>
    %32 = vector.broadcast %31 : vector<1x8xf32> to vector<16x8xf32>
    %33 = arith.addf %30, %32 : vector<16x8xf32>
    %c0_28 = arith.constant 0 : index
    %c0_29 = arith.constant 0 : index
    %34 = vector.load %arg12[%c0_28, %c0_29] : memref<16x8xf32, #tpu.memory_space<vmem>>, vector<16x8xf32>
    tpu.vector_store %arg12[%c0_28, %c0_29], %33 {strides = array<i32>} : memref<16x8xf32, #tpu.memory_space<vmem>>, vector<16x8xf32>,
    return
  }
  func.func @transform_0(%arg0: i32) -> (i32, i32) {
    %c0_i32 = arith.constant 0 : i32
    %c0_i32_0 = arith.constant 0 : i32
    return %arg0, %c0_i32 : i32, i32
  }
  func.func @transform_1(%arg0: i32) -> (i32, i32) {
    %c0_i32 = arith.constant 0 : i32
    %c0_i32_0 = arith.constant 0 : i32
    return %arg0, %c0_i32 : i32, i32
  }
  func.func @transform_2(%arg0: i32) -> (i32, i32) {
    %c0_i32 = arith.constant 0 : i32
    %c0_i32_0 = arith.constant 0 : i32
    %c0_i32_1 = arith.constant 0 : i32
    return %c0_i32, %c0_i32_0 : i32, i32
  }
  func.func @transform_3(%arg0: i32) -> (i32, i32) {
    %c0_i32 = arith.constant 0 : i32
    %c0_i32_0 = arith.constant 0 : i32
    %c0_i32_1 = arith.constant 0 : i32
    return %c0_i32, %c0_i32_0 : i32, i32
  }
  func.func @transform_4(%arg0: i32) -> (i32, i32) {
    %c0_i32 = arith.constant 0 : i32
    %c0_i32_0 = arith.constant 0 : i32
    %c0_i32_1 = arith.constant 0 : i32
    return %c0_i32, %c0_i32_0 : i32, i32
  }
  func.func @transform_5(%arg0: i32) -> (i32, i32) {
    %c0_i32 = arith.constant 0 : i32
    %c0_i32_0 = arith.constant 0 : i32
    %c0_i32_1 = arith.constant 0 : i32
    return %c0_i32, %c0_i32_0 : i32, i32
  }
  func.func @transform_6(%arg0: i32) -> (i32, i32) {
    %c0_i32 = arith.constant 0 : i32
    %c0_i32_0 = arith.constant 0 : i32
    %c0_i32_1 = arith.constant 0 : i32
    return %c0_i32, %c0_i32_0 : i32, i32
  }
  func.func @transform_7(%arg0: i32) -> (i32, i32) {
    %c0_i32 = arith.constant 0 : i32
    %c0_i32_0 = arith.constant 0 : i32
    %c0_i32_1 = arith.constant 0 : i32
    return %c0_i32, %c0_i32_0 : i32, i32
  }
  func.func @transform_8(%arg0: i32) -> (i32, i32) {
    %c0_i32 = arith.constant 0 : i32
    %c0_i32_0 = arith.constant 0 : i32
    %c0_i32_1 = arith.constant 0 : i32
    return %c0_i32, %c0_i32_0 : i32, i32
  }
  func.func @transform_9(%arg0: i32) -> (i32, i32) {
    %c0_i32 = arith.constant 0 : i32
    %c0_i32_0 = arith.constant 0 : i32
    %c0_i32_1 = arith.constant 0 : i32
    return %c0_i32, %c0_i32_0 : i32, i32
  }
  func.func @transform_10(%arg0: i32) -> (i32, i32) {
    %c0_i32 = arith.constant 0 : i32
    %c0_i32_0 = arith.constant 0 : i32
    %c0_i32_1 = arith.constant 0 : i32
    return %c0_i32, %c0_i32_0 : i32, i32
  }
  func.func @transform_11(%arg0: i32) -> (i32, i32) {
    %c0_i32 = arith.constant 0 : i32
    %c0_i32_0 = arith.constant 0 : i32
    return %arg0, %c0_i32 : i32, i32
  }
}

</mosaic_0001>

<llo_original>
// kernel: tpu_custom_call.1
$region0: #{tpu_custom_call.1}
  #allocation0 [shape = 'u32[]', space=smem, size = 0x4, offset = 0x4, fixed_abs, tag = 'smem constant byte address 0x4 - core index']
  #allocation1 [shape = 'u32[144,128]{1,0:T(1,128)}', space=vmem, size = 0x12000, scoped, tag = 'internal scratch']
  %s0 = inlined_call_operand.vmem [shape: bf16[16,512], index: 0, kind: input, shape index: {}]
  %s1 = inlined_call_operand.vmem [shape: bf16[16,512], index: 1, kind: input, shape index: {}]
  %s2 = inlined_call_operand.hbm [shape: bf16[512,512], index: 2, kind: input, shape index: {}]
  %s3 = inlined_call_operand.vmem [shape: f32[1,512], index: 3, kind: input, shape index: {}]
  %s4 = inlined_call_operand.hbm [shape: bf16[512,512], index: 4, kind: input, shape index: {}]
  %s5 = inlined_call_operand.vmem [shape: f32[1,512], index: 5, kind: input, shape index: {}]
  %s6 = inlined_call_operand.hbm [shape: bf16[512,256], index: 6, kind: input, shape index: {}]
  %s7 = inlined_call_operand.hbm [shape: bf16[512,256], index: 7, kind: input, shape index: {}]
  %s8 = inlined_call_operand.vmem [shape: f32[1,256], index: 8, kind: input, shape index: {}]
  %s9 = inlined_call_operand.vmem [shape: bf16[256,8], index: 9, kind: input, shape index: {}]
  %s10 = inlined_call_operand.vmem [shape: f32[1,8], index: 10, kind: input, shape index: {}]
  %s11 = inlined_call_operand.vmem [shape: f32[16,8], index: 11, kind: output, shape index: {}]
  %s12 = sld [smem:[#allocation0]]
  $region70: #{tpu_custom_call.1} parent=0
    _
  %s14 = ssub.s32 1, %s12
  %s15 = scalar_select 0, %s14, %s12
  $region1: #{tpu_custom_call.1} parent=0
    #allocation2 [shape = 'u8[524288]{0}', space=vmem, size = 0x80000, scoped, tag = 'input window, operand 2, single buffered']
    #allocation3 [shape = 's32[1]{0}', space=sflag, size = 0x4, scoped, tag = 'scoped memory for tpu_custom_call.1']
    #allocation4 [shape = 'u8[524288]{0}', space=vmem, size = 0x80000, scoped, tag = 'input window, operand 4, single buffered']
    #allocation5 [shape = 's32[1]{0}', space=sflag, size = 0x4, scoped, tag = 'scoped memory for tpu_custom_call.1']
    #allocation6 [shape = 'u8[262144]{0}', space=vmem, size = 0x40000, scoped, tag = 'input window, operand 6, single buffered']
    #allocation7 [shape = 'u8[262144]{0}', space=vmem, size = 0x40000, scoped, tag = 'input window, operand 7, single buffered']
    #allocation8 [shape = 's32[1]{0}', space=sflag, size = 0x4, scoped, tag = 'scoped memory for tpu_custom_call.1']
    %16 = vsyncpa [#allocation3], 0
    %17 = vsyncpa [#allocation5], 0
    %18 = vsyncpa [#allocation8], 0
    // Predicated region
    $region2: #{tpu_custom_call.1} parent=1 // pred_check
      _
    $region3: #{tpu_custom_call.1} parent=1 // pred_check_branch
      %20 = sbr.rel (0) target = $region5
    $region4: #{tpu_custom_call.1} parent=1 // pred_region
      _
    $region5: #{tpu_custom_call.1} parent=1 // pred_fallthru
      _
    // Predicated region
    $region6: #{tpu_custom_call.1} parent=1 // pred_check
      _
    $region7: #{tpu_custom_call.1} parent=1 // pred_check_branch
      %22 = sbr.rel (0) target = $region9
    $region8: #{tpu_custom_call.1} parent=1 // pred_region
      _
    $region9: #{tpu_custom_call.1} parent=1 // pred_fallthru
      _
    // Predicated region
    $region10: #{tpu_custom_call.1} parent=1 // pred_check
      _
    $region11: #{tpu_custom_call.1} parent=1 // pred_check_branch
      %24 = sbr.rel (0) target = $region13
    $region12: #{tpu_custom_call.1} parent=1 // pred_region
      %s26 = ssub.s32 16384, 16384
      %27 = vsyncadd [#allocation3], %s26
      %s28 = sshll.u32 [#allocation2], 4
      %s29 = int_to_ptr.vmem [resolvable:$true] %s28
      %34 = dma.hbm_to_vmem [thread:$0]  %s2, 16384, %s29, [#allocation3], 256, 256, 16
    $region13: #{tpu_custom_call.1} parent=1 // pred_fallthru
      _
    // Predicated region
    $region14: #{tpu_custom_call.1} parent=1 // pred_check
      _
    $region15: #{tpu_custom_call.1} parent=1 // pred_check_branch
      %36 = sbr.rel (0) target = $region17
    $region16: #{tpu_custom_call.1} parent=1 // pred_region
      _
    $region17: #{tpu_custom_call.1} parent=1 // pred_fallthru
      _
    // Predicated region
    $region18: #{tpu_custom_call.1} parent=1 // pred_check
      _
    $region19: #{tpu_custom_call.1} parent=1 // pred_check_branch
      %38 = sbr.rel (0) target = $region21
    $region20: #{tpu_custom_call.1} parent=1 // pred_region
      %s40 = ssub.s32 16384, 16384
      %41 = vsyncadd [#allocation5], %s40
      %s42 = sshll.u32 [#allocation4], 4
      %s43 = int_to_ptr.vmem [resolvable:$true] %s42
      %48 = dma.hbm_to_vmem [thread:$0]  %s4, 16384, %s43, [#allocation5], 256, 256, 16
    $region21: #{tpu_custom_call.1} parent=1 // pred_fallthru
      _
    // Predicated region
    $region22: #{tpu_custom_call.1} parent=1 // pred_check
      _
    $region23: #{tpu_custom_call.1} parent=1 // pred_check_branch
      %50 = sbr.rel (0) target = $region25
    $region24: #{tpu_custom_call.1} parent=1 // pred_region
      _
    $region25: #{tpu_custom_call.1} parent=1 // pred_fallthru
      _
    // Predicated region
    $region26: #{tpu_custom_call.1} parent=1 // pred_check
      _
    $region27: #{tpu_custom_call.1} parent=1 // pred_check_branch
      %52 = sbr.rel (0) target = $region29
    $region28: #{tpu_custom_call.1} parent=1 // pred_region
      %s54 = ssub.s32 8192, 8192
      %55 = vsyncadd [#allocation5], %s54
      %s56 = sshll.u32 [#allocation6], 4
      %s57 = int_to_ptr.vmem [resolvable:$true] %s56
      %62 = dma.hbm_to_vmem [thread:$0]  %s6, 8192, %s57, [#allocation5], 128, 128, 8
    $region29: #{tpu_custom_call.1} parent=1 // pred_fallthru
      _
    // Predicated region
    $region30: #{tpu_custom_call.1} parent=1 // pred_check
      _
    $region31: #{tpu_custom_call.1} parent=1 // pred_check_branch
      %64 = sbr.rel (0) target = $region33
    $region32: #{tpu_custom_call.1} parent=1 // pred_region
      %s66 = ssub.s32 8192, 8192
      %67 = vsyncadd [#allocation8], %s66
      %s68 = sshll.u32 [#allocation7], 4
      %s69 = int_to_ptr.vmem [resolvable:$true] %s68
      %74 = dma.hbm_to_vmem [thread:$0]  %s7, 8192, %s69, [#allocation8], 128, 128, 8
    $region33: #{tpu_custom_call.1} parent=1 // pred_fallthru
      _
    // Predicated region
    $region34: #{tpu_custom_call.1} parent=1 // pred_check
      _
    $region35: #{tpu_custom_call.1} parent=1 // pred_check_branch
      %76 = sbr.rel (0) target = $region37
    $region36: #{tpu_custom_call.1} parent=1 // pred_region
      _
    $region37: #{tpu_custom_call.1} parent=1 // pred_fallthru
      _
    // Predicated region
    $region38: #{tpu_custom_call.1} parent=1 // pred_check
      _
    $region39: #{tpu_custom_call.1} parent=1 // pred_check_branch
      %78 = sbr.rel (0) target = $region41
    $region40: #{tpu_custom_call.1} parent=1 // pred_region
      _
    $region41: #{tpu_custom_call.1} parent=1 // pred_fallthru
      _
    // Predicated region
    $region42: #{tpu_custom_call.1} parent=1 // pred_check
      _
    $region43: #{tpu_custom_call.1} parent=1 // pred_check_branch
      %80 = sbr.rel (0) target = $region45
    $region44: #{tpu_custom_call.1} parent=1 // pred_region
      _
    $region45: #{tpu_custom_call.1} parent=1 // pred_fallthru
      _
    // Predicated region
    $region46: #{tpu_custom_call.1} parent=1 // pred_check
      _
    $region47: #{tpu_custom_call.1} parent=1 // pred_check_branch
      %82 = sbr.rel (0) target = $region49
    $region48: #{tpu_custom_call.1} parent=1 // pred_region
      %83 = dma.done [#allocation3], 16384
    $region49: #{tpu_custom_call.1} parent=1 // pred_fallthru
      _
    // Predicated region
    $region50: #{tpu_custom_call.1} parent=1 // pred_check
      _
    $region51: #{tpu_custom_call.1} parent=1 // pred_check_branch
      %85 = sbr.rel (0) target = $region53
    $region52: #{tpu_custom_call.1} parent=1 // pred_region
      %86 = dma.done [#allocation5], 16384
    $region53: #{tpu_custom_call.1} parent=1 // pred_fallthru
      _
    // Predicated region
    $region54: #{tpu_custom_call.1} parent=1 // pred_check
      _
    $region55: #{tpu_custom_call.1} parent=1 // pred_check_branch
      %88 = sbr.rel (0) target = $region57
    $region56: #{tpu_custom_call.1} parent=1 // pred_region
      %89 = dma.done [#allocation5], 8192
    $region57: #{tpu_custom_call.1} parent=1 // pred_fallthru
      _
    // Predicated region
    $region58: #{tpu_custom_call.1} parent=1 // pred_check
      _
    $region59: #{tpu_custom_call.1} parent=1 // pred_check_branch
      %91 = sbr.rel (0) target = $region61
    $region60: #{tpu_custom_call.1} parent=1 // pred_region
      %92 = dma.done [#allocation8], 8192
    $region61: #{tpu_custom_call.1} parent=1 // pred_fallthru
      _
    %v94 = vld [vmem:[%s0] sm:$0xff]
    %v95 = vld [vmem:[%s0 + $0x8] sm:$0xff]
    %v96 = vld [vmem:[%s0 + $0x10] sm:$0xff]
    %v97 = vld [vmem:[%s0 + $0x18] sm:$0xff]
    %v98 = vld [vmem:[#allocation2] sm:$0xff]
    %v99 = vld [vmem:[#allocation2 + $0x8] sm:$0xff]
    %v100 = vld [vmem:[#allocation2 + $0x10] sm:$0xff]
    %v101 = vld [vmem:[#allocation2 + $0x18] sm:$0xff]
    %v102 = vld [vmem:[#allocation2 + $0x20] sm:$0xff]
    %v103 = vld [vmem:[#allocation2 + $0x28] sm:$0xff]
    %v104 = vld [vmem:[#allocation2 + $0x30] sm:$0xff]
    %v105 = vld [vmem:[#allocation2 + $0x38] sm:$0xff]
    %v106 = vld [vmem:[#allocation2 + $0x40] sm:$0xff]
    %v107 = vld [vmem:[#allocation2 + $0x48] sm:$0xff]
    %v108 = vld [vmem:[#allocation2 + $0x50] sm:$0xff]
    %v109 = vld [vmem:[#allocation2 + $0x58] sm:$0xff]
    %v110 = vld [vmem:[#allocation2 + $0x60] sm:$0xff]
    %v111 = vld [vmem:[#allocation2 + $0x68] sm:$0xff]
    %v112 = vld [vmem:[#allocation2 + $0x70] sm:$0xff]
    %v113 = vld [vmem:[#allocation2 + $0x78] sm:$0xff]
    %v114 = vld [vmem:[#allocation2 + $0x80] sm:$0xff]
    %v115 = vld [vmem:[#allocation2 + $0x88] sm:$0xff]
    %v116 = vld [vmem:[#allocation2 + $0x90] sm:$0xff]
    %v117 = vld [vmem:[#allocation2 + $0x98] sm:$0xff]
    %v118 = vld [vmem:[#allocation2 + $0xa0] sm:$0xff]
    %v119 = vld [vmem:[#allocation2 + $0xa8] sm:$0xff]
    %v120 = vld [vmem:[#allocation2 + $0xb0] sm:$0xff]
    %v121 = vld [vmem:[#allocation2 + $0xb8] sm:$0xff]
    %v122 = vld [vmem:[#allocation2 + $0xc0] sm:$0xff]
    %v123 = vld [vmem:[#allocation2 + $0xc8] sm:$0xff]
    %v124 = vld [vmem:[#allocation2 + $0xd0] sm:$0xff]
    %v125 = vld [vmem:[#allocation2 + $0xd8] sm:$0xff]
    %v126 = vld [vmem:[#allocation2 + $0xe0] sm:$0xff]
    %v127 = vld [vmem:[#allocation2 + $0xe8] sm:$0xff]
    %v128 = vld [vmem:[#allocation2 + $0xf0] sm:$0xff]
    %v129 = vld [vmem:[#allocation2 + $0xf8] sm:$0xff]
    %v130 = vld [vmem:[#allocation2 + $0x100] sm:$0xff]
    %v131 = vld [vmem:[#allocation2 + $0x108] sm:$0xff]
    %v132 = vld [vmem:[#allocation2 + $0x110] sm:$0xff]
    %v133 = vld [vmem:[#allocation2 + $0x118] sm:$0xff]
    %v134 = vld [vmem:[#allocation2 + $0x120] sm:$0xff]
    %v135 = vld [vmem:[#allocation2 + $0x128] sm:$0xff]
    %v136 = vld [vmem:[#allocation2 + $0x130] sm:$0xff]
    %v137 = vld [vmem:[#allocation2 + $0x138] sm:$0xff]
    %v138 = vld [vmem:[#allocation2 + $0x140] sm:$0xff]
    %v139 = vld [vmem:[#allocation2 + $0x148] sm:$0xff]
    %v140 = vld [vmem:[#allocation2 + $0x150] sm:$0xff]
    %v141 = vld [vmem:[#allocation2 + $0x158] sm:$0xff]
    %v142 = vld [vmem:[#allocation2 + $0x160] sm:$0xff]
    %v143 = vld [vmem:[#allocation2 + $0x168] sm:$0xff]
    %v144 = vld [vmem:[#allocation2 + $0x170] sm:$0xff]
    %v145 = vld [vmem:[#allocation2 + $0x178] sm:$0xff]
    %v146 = vld [vmem:[#allocation2 + $0x180] sm:$0xff]
    %v147 = vld [vmem:[#allocation2 + $0x188] sm:$0xff]
    %v148 = vld [vmem:[#allocation2 + $0x190] sm:$0xff]
    %v149 = vld [vmem:[#allocation2 + $0x198] sm:$0xff]
    %v150 = vld [vmem:[#allocation2 + $0x1a0] sm:$0xff]
    %v151 = vld [vmem:[#allocation2 + $0x1a8] sm:$0xff]
    %v152 = vld [vmem:[#allocation2 + $0x1b0] sm:$0xff]
    %v153 = vld [vmem:[#allocation2 + $0x1b8] sm:$0xff]
    %v154 = vld [vmem:[#allocation2 + $0x1c0] sm:$0xff]
    %v155 = vld [vmem:[#allocation2 + $0x1c8] sm:$0xff]
    %v156 = vld [vmem:[#allocation2 + $0x1d0] sm:$0xff]
    %v157 = vld [vmem:[#allocation2 + $0x1d8] sm:$0xff]
    %v158 = vld [vmem:[#allocation2 + $0x1e0] sm:$0xff]
    %v159 = vld [vmem:[#allocation2 + $0x1e8] sm:$0xff]
    %v160 = vld [vmem:[#allocation2 + $0x1f0] sm:$0xff]
    %v161 = vld [vmem:[#allocation2 + $0x1f8] sm:$0xff]
    %v162 = vld [vmem:[#allocation2 + $0x200] sm:$0xff]
    %v163 = vld [vmem:[#allocation2 + $0x208] sm:$0xff]
    %v164 = vld [vmem:[#allocation2 + $0x210] sm:$0xff]
    %v165 = vld [vmem:[#allocation2 + $0x218] sm:$0xff]
    %v166 = vld [vmem:[#allocation2 + $0x220] sm:$0xff]
    %v167 = vld [vmem:[#allocation2 + $0x228] sm:$0xff]
    %v168 = vld [vmem:[#allocation2 + $0x230] sm:$0xff]
    %v169 = vld [vmem:[#allocation2 + $0x238] sm:$0xff]
    %v170 = vld [vmem:[#allocation2 + $0x240] sm:$0xff]
    %v171 = vld [vmem:[#allocation2 + $0x248] sm:$0xff]
    %v172 = vld [vmem:[#allocation2 + $0x250] sm:$0xff]
    %v173 = vld [vmem:[#allocation2 + $0x258] sm:$0xff]
    %v174 = vld [vmem:[#allocation2 + $0x260] sm:$0xff]
    %v175 = vld [vmem:[#allocation2 + $0x268] sm:$0xff]
    %v176 = vld [vmem:[#allocation2 + $0x270] sm:$0xff]
    %v177 = vld [vmem:[#allocation2 + $0x278] sm:$0xff]
    %v178 = vld [vmem:[#allocation2 + $0x280] sm:$0xff]
    %v179 = vld [vmem:[#allocation2 + $0x288] sm:$0xff]
    %v180 = vld [vmem:[#allocation2 + $0x290] sm:$0xff]
    %v181 = vld [vmem:[#allocation2 + $0x298] sm:$0xff]
    %v182 = vld [vmem:[#allocation2 + $0x2a0] sm:$0xff]
    %v183 = vld [vmem:[#allocation2 + $0x2a8] sm:$0xff]
    %v184 = vld [vmem:[#allocation2 + $0x2b0] sm:$0xff]
    %v185 = vld [vmem:[#allocation2 + $0x2b8] sm:$0xff]
    %v186 = vld [vmem:[#allocation2 + $0x2c0] sm:$0xff]
    %v187 = vld [vmem:[#allocation2 + $0x2c8] sm:$0xff]
    %v188 = vld [vmem:[#allocation2 + $0x2d0] sm:$0xff]
    %v189 = vld [vmem:[#allocation2 + $0x2d8] sm:$0xff]
    %v190 = vld [vmem:[#allocation2 + $0x2e0] sm:$0xff]
    %v191 = vld [vmem:[#allocation2 + $0x2e8] sm:$0xff]
    %v192 = vld [vmem:[#allocation2 + $0x2f0] sm:$0xff]
    %v193 = vld [vmem:[#allocation2 + $0x2f8] sm:$0xff]
    %v194 = vld [vmem:[#allocation2 + $0x300] sm:$0xff]
    %v195 = vld [vmem:[#allocation2 + $0x308] sm:$0xff]
    %v196 = vld [vmem:[#allocation2 + $0x310] sm:$0xff]
    %v197 = vld [vmem:[#allocation2 + $0x318] sm:$0xff]
    %v198 = vld [vmem:[#allocation2 + $0x320] sm:$0xff]
    %v199 = vld [vmem:[#allocation2 + $0x328] sm:$0xff]
    %v200 = vld [vmem:[#allocation2 + $0x330] sm:$0xff]
    %v201 = vld [vmem:[#allocation2 + $0x338] sm:$0xff]
    %v202 = vld [vmem:[#allocation2 + $0x340] sm:$0xff]
    %v203 = vld [vmem:[#allocation2 + $0x348] sm:$0xff]
    %v204 = vld [vmem:[#allocation2 + $0x350] sm:$0xff]
    %v205 = vld [vmem:[#allocation2 + $0x358] sm:$0xff]
    %v206 = vld [vmem:[#allocation2 + $0x360] sm:$0xff]
    %v207 = vld [vmem:[#allocation2 + $0x368] sm:$0xff]
    %v208 = vld [vmem:[#allocation2 + $0x370] sm:$0xff]
    %v209 = vld [vmem:[#allocation2 + $0x378] sm:$0xff]
    %v210 = vld [vmem:[#allocation2 + $0x380] sm:$0xff]
    %v211 = vld [vmem:[#allocation2 + $0x388] sm:$0xff]
    %v212 = vld [vmem:[#allocation2 + $0x390] sm:$0xff]
    %v213 = vld [vmem:[#allocation2 + $0x398] sm:$0xff]
    %v214 = vld [vmem:[#allocation2 + $0x3a0] sm:$0xff]
    %v215 = vld [vmem:[#allocation2 + $0x3a8] sm:$0xff]
    %v216 = vld [vmem:[#allocation2 + $0x3b0] sm:$0xff]
    %v217 = vld [vmem:[#allocation2 + $0x3b8] sm:$0xff]
    %v218 = vld [vmem:[#allocation2 + $0x3c0] sm:$0xff]
    %v219 = vld [vmem:[#allocation2 + $0x3c8] sm:$0xff]
    %v220 = vld [vmem:[#allocation2 + $0x3d0] sm:$0xff]
    %v221 = vld [vmem:[#allocation2 + $0x3d8] sm:$0xff]
    %v222 = vld [vmem:[#allocation2 + $0x3e0] sm:$0xff]
    %v223 = vld [vmem:[#allocation2 + $0x3e8] sm:$0xff]
    %v224 = vld [vmem:[#allocation2 + $0x3f0] sm:$0xff]
    %v225 = vld [vmem:[#allocation2 + $0x3f8] sm:$0xff]
    %v226 = vld [vmem:[%s3] sm:$0xf]
    %v228 = vlaneseq
    %v229 = vshrl.u32 %v228, 7
    %v230 = vsub.s32 0, %v229
    %v231 = vrot.slane %v226, %v230
    %v232 = vlaneseq
    %v233 = vshrl.u32 %v232, 7
    %v234 = vsub.s32 1, %v233
    %v235 = vrot.slane %v226, %v234
    %v236 = vlaneseq
    %v237 = vshrl.u32 %v236, 7
    %v238 = vsub.s32 2, %v237
    %v239 = vrot.slane %v226, %v238
    %v240 = vlaneseq
    %v241 = vshrl.u32 %v240, 7
    %v242 = vsub.s32 3, %v241
    %v243 = vrot.slane %v226, %v242
    %v252 = vunpack.c.l.b16 %v94
    %v253 = vunpack.c.h.b16 %v94
    %v254 = vunpack.c.l.b16 %v95
    %v255 = vunpack.c.h.b16 %v95
    %v256 = vunpack.c.l.b16 %v96
    %v257 = vunpack.c.h.b16 %v96
    %v258 = vunpack.c.l.b16 %v97
    %v259 = vunpack.c.h.b16 %v97
    %v260 = vpack.c.b16 %v256, %v252
    %v261 = vpack.c.b16 %v257, %v253
    %v262 = vpack.c.b16 %v258, %v254
    %v263 = vpack.c.b16 %v259, %v255
    %v396 = vunpack.c.l.b16 %v98
    %v397 = vunpack.c.h.b16 %v98
    %v398 = vunpack.c.l.b16 %v99
    %v399 = vunpack.c.h.b16 %v99
    %v400 = vunpack.c.l.b16 %v100
    %v401 = vunpack.c.h.b16 %v100
    %v402 = vunpack.c.l.b16 %v101
    %v403 = vunpack.c.h.b16 %v101
    %v404 = vunpack.c.l.b16 %v102
    %v405 = vunpack.c.h.b16 %v102
    %v406 = vunpack.c.l.b16 %v103
    %v407 = vunpack.c.h.b16 %v103
    %v408 = vunpack.c.l.b16 %v104
    %v409 = vunpack.c.h.b16 %v104
    %v410 = vunpack.c.l.b16 %v105
    %v411 = vunpack.c.h.b16 %v105
    %v412 = vunpack.c.l.b16 %v106
    %v413 = vunpack.c.h.b16 %v106
    %v414 = vunpack.c.l.b16 %v107
    %v415 = vunpack.c.h.b16 %v107
    %v416 = vunpack.c.l.b16 %v108
    %v417 = vunpack.c.h.b16 %v108
    %v418 = vunpack.c.l.b16 %v109
    %v419 = vunpack.c.h.b16 %v109
    %v420 = vunpack.c.l.b16 %v110
    %v421 = vunpack.c.h.b16 %v110
    %v422 = vunpack.c.l.b16 %v111
    %v423 = vunpack.c.h.b16 %v111
    %v424 = vunpack.c.l.b16 %v112
    %v425 = vunpack.c.h.b16 %v112
    %v426 = vunpack.c.l.b16 %v113
    %v427 = vunpack.c.h.b16 %v113
    %v428 = vunpack.c.l.b16 %v114
    %v429 = vunpack.c.h.b16 %v114
    %v430 = vunpack.c.l.b16 %v115
    %v431 = vunpack.c.h.b16 %v115
    %v432 = vunpack.c.l.b16 %v116
    %v433 = vunpack.c.h.b16 %v116
    %v434 = vunpack.c.l.b16 %v117
    %v435 = vunpack.c.h.b16 %v117
    %v436 = vunpack.c.l.b16 %v118
    %v437 = vunpack.c.h.b16 %v118
    %v438 = vunpack.c.l.b16 %v119
    %v439 = vunpack.c.h.b16 %v119
    %v440 = vunpack.c.l.b16 %v120
    %v441 = vunpack.c.h.b16 %v120
    %v442 = vunpack.c.l.b16 %v121
    %v443 = vunpack.c.h.b16 %v121
    %v444 = vunpack.c.l.b16 %v122
    %v445 = vunpack.c.h.b16 %v122
    %v446 = vunpack.c.l.b16 %v123
    %v447 = vunpack.c.h.b16 %v123
    %v448 = vunpack.c.l.b16 %v124
    %v449 = vunpack.c.h.b16 %v124
    %v450 = vunpack.c.l.b16 %v125
    %v451 = vunpack.c.h.b16 %v125
    %v452 = vunpack.c.l.b16 %v126
    %v453 = vunpack.c.h.b16 %v126
    %v454 = vunpack.c.l.b16 %v127
    %v455 = vunpack.c.h.b16 %v127
    %v456 = vunpack.c.l.b16 %v128
    %v457 = vunpack.c.h.b16 %v128
    %v458 = vunpack.c.l.b16 %v129
    %v459 = vunpack.c.h.b16 %v129
    %v460 = vunpack.c.l.b16 %v130
    %v461 = vunpack.c.h.b16 %v130
    %v462 = vunpack.c.l.b16 %v131
    %v463 = vunpack.c.h.b16 %v131
    %v464 = vunpack.c.l.b16 %v132
    %v465 = vunpack.c.h.b16 %v132
    %v466 = vunpack.c.l.b16 %v133
    %v467 = vunpack.c.h.b16 %v133
    %v468 = vunpack.c.l.b16 %v134
    %v469 = vunpack.c.h.b16 %v134
    %v470 = vunpack.c.l.b16 %v135
    %v471 = vunpack.c.h.b16 %v135
    %v472 = vunpack.c.l.b16 %v136
    %v473 = vunpack.c.h.b16 %v136
    %v474 = vunpack.c.l.b16 %v137
    %v475 = vunpack.c.h.b16 %v137
    %v476 = vunpack.c.l.b16 %v138
    %v477 = vunpack.c.h.b16 %v138
    %v478 = vunpack.c.l.b16 %v139
    %v479 = vunpack.c.h.b16 %v139
    %v480 = vunpack.c.l.b16 %v140
    %v481 = vunpack.c.h.b16 %v140
    %v482 = vunpack.c.l.b16 %v141
    %v483 = vunpack.c.h.b16 %v141
    %v484 = vunpack.c.l.b16 %v142
    %v485 = vunpack.c.h.b16 %v142
    %v486 = vunpack.c.l.b16 %v143
    %v487 = vunpack.c.h.b16 %v143
    %v488 = vunpack.c.l.b16 %v144
    %v489 = vunpack.c.h.b16 %v144
    %v490 = vunpack.c.l.b16 %v145
    %v491 = vunpack.c.h.b16 %v145
    %v492 = vunpack.c.l.b16 %v146
    %v493 = vunpack.c.h.b16 %v146
    %v494 = vunpack.c.l.b16 %v147
    %v495 = vunpack.c.h.b16 %v147
    %v496 = vunpack.c.l.b16 %v148
    %v497 = vunpack.c.h.b16 %v148
    %v498 = vunpack.c.l.b16 %v149
    %v499 = vunpack.c.h.b16 %v149
    %v500 = vunpack.c.l.b16 %v150
    %v501 = vunpack.c.h.b16 %v150
    %v502 = vunpack.c.l.b16 %v151
    %v503 = vunpack.c.h.b16 %v151
    %v504 = vunpack.c.l.b16 %v152
    %v505 = vunpack.c.h.b16 %v152
    %v506 = vunpack.c.l.b16 %v153
    %v507 = vunpack.c.h.b16 %v153
    %v508 = vunpack.c.l.b16 %v154
    %v509 = vunpack.c.h.b16 %v154
    %v510 = vunpack.c.l.b16 %v155
    %v511 = vunpack.c.h.b16 %v155
    %v512 = vunpack.c.l.b16 %v156
    %v513 = vunpack.c.h.b16 %v156
    %v514 = vunpack.c.l.b16 %v157
    %v515 = vunpack.c.h.b16 %v157
    %v516 = vunpack.c.l.b16 %v158
    %v517 = vunpack.c.h.b16 %v158
    %v518 = vunpack.c.l.b16 %v159
    %v519 = vunpack.c.h.b16 %v159
    %v520 = vunpack.c.l.b16 %v160
    %v521 = vunpack.c.h.b16 %v160
    %v522 = vunpack.c.l.b16 %v161
    %v523 = vunpack.c.h.b16 %v161
    %v524 = vunpack.c.l.b16 %v162
    %v525 = vunpack.c.h.b16 %v162
    %v526 = vunpack.c.l.b16 %v163
    %v527 = vunpack.c.h.b16 %v163
    %v528 = vunpack.c.l.b16 %v164
    %v529 = vunpack.c.h.b16 %v164
    %v530 = vunpack.c.l.b16 %v165
    %v531 = vunpack.c.h.b16 %v165
    %v532 = vunpack.c.l.b16 %v166
    %v533 = vunpack.c.h.b16 %v166
    %v534 = vunpack.c.l.b16 %v167
    %v535 = vunpack.c.h.b16 %v167
    %v536 = vunpack.c.l.b16 %v168
    %v537 = vunpack.c.h.b16 %v168
    %v538 = vunpack.c.l.b16 %v169
    %v539 = vunpack.c.h.b16 %v169
    %v540 = vunpack.c.l.b16 %v170
    %v541 = vunpack.c.h.b16 %v170
    %v542 = vunpack.c.l.b16 %v171
    %v543 = vunpack.c.h.b16 %v171
    %v544 = vunpack.c.l.b16 %v172
    %v545 = vunpack.c.h.b16 %v172
    %v546 = vunpack.c.l.b16 %v173
    %v547 = vunpack.c.h.b16 %v173
    %v548 = vunpack.c.l.b16 %v174
    %v549 = vunpack.c.h.b16 %v174
    %v550 = vunpack.c.l.b16 %v175
    %v551 = vunpack.c.h.b16 %v175
    %v552 = vunpack.c.l.b16 %v176
    %v553 = vunpack.c.h.b16 %v176
    %v554 = vunpack.c.l.b16 %v177
    %v555 = vunpack.c.h.b16 %v177
    %v556 = vunpack.c.l.b16 %v178
    %v557 = vunpack.c.h.b16 %v178
    %v558 = vunpack.c.l.b16 %v179
    %v559 = vunpack.c.h.b16 %v179
    %v560 = vunpack.c.l.b16 %v180
    %v561 = vunpack.c.h.b16 %v180
    %v562 = vunpack.c.l.b16 %v181
    %v563 = vunpack.c.h.b16 %v181
    %v564 = vunpack.c.l.b16 %v182
    %v565 = vunpack.c.h.b16 %v182
    %v566 = vunpack.c.l.b16 %v183
    %v567 = vunpack.c.h.b16 %v183
    %v568 = vunpack.c.l.b16 %v184
    %v569 = vunpack.c.h.b16 %v184
    %v570 = vunpack.c.l.b16 %v185
    %v571 = vunpack.c.h.b16 %v185
    %v572 = vunpack.c.l.b16 %v186
    %v573 = vunpack.c.h.b16 %v186
    %v574 = vunpack.c.l.b16 %v187
    %v575 = vunpack.c.h.b16 %v187
    %v576 = vunpack.c.l.b16 %v188
    %v577 = vunpack.c.h.b16 %v188
    %v578 = vunpack.c.l.b16 %v189
    %v579 = vunpack.c.h.b16 %v189
    %v580 = vunpack.c.l.b16 %v190
    %v581 = vunpack.c.h.b16 %v190
    %v582 = vunpack.c.l.b16 %v191
    %v583 = vunpack.c.h.b16 %v191
    %v584 = vunpack.c.l.b16 %v192
    %v585 = vunpack.c.h.b16 %v192
    %v586 = vunpack.c.l.b16 %v193
    %v587 = vunpack.c.h.b16 %v193
    %v588 = vunpack.c.l.b16 %v194
    %v589 = vunpack.c.h.b16 %v194
    %v590 = vunpack.c.l.b16 %v195
    %v591 = vunpack.c.h.b16 %v195
    %v592 = vunpack.c.l.b16 %v196
    %v593 = vunpack.c.h.b16 %v196
    %v594 = vunpack.c.l.b16 %v197
    %v595 = vunpack.c.h.b16 %v197
    %v596 = vunpack.c.l.b16 %v198
    %v597 = vunpack.c.h.b16 %v198
    %v598 = vunpack.c.l.b16 %v199
    %v599 = vunpack.c.h.b16 %v199
    %v600 = vunpack.c.l.b16 %v200
    %v601 = vunpack.c.h.b16 %v200
    %v602 = vunpack.c.l.b16 %v201
    %v603 = vunpack.c.h.b16 %v201
    %v604 = vunpack.c.l.b16 %v202
    %v605 = vunpack.c.h.b16 %v202
    %v606 = vunpack.c.l.b16 %v203
    %v607 = vunpack.c.h.b16 %v203
    %v608 = vunpack.c.l.b16 %v204
    %v609 = vunpack.c.h.b16 %v204
    %v610 = vunpack.c.l.b16 %v205
    %v611 = vunpack.c.h.b16 %v205
    %v612 = vunpack.c.l.b16 %v206
    %v613 = vunpack.c.h.b16 %v206
    %v614 = vunpack.c.l.b16 %v207
    %v615 = vunpack.c.h.b16 %v207
    %v616 = vunpack.c.l.b16 %v208
    %v617 = vunpack.c.h.b16 %v208
    %v618 = vunpack.c.l.b16 %v209
    %v619 = vunpack.c.h.b16 %v209
    %v620 = vunpack.c.l.b16 %v210
    %v621 = vunpack.c.h.b16 %v210
    %v622 = vunpack.c.l.b16 %v211
    %v623 = vunpack.c.h.b16 %v211
    %v624 = vunpack.c.l.b16 %v212
    %v625 = vunpack.c.h.b16 %v212
    %v626 = vunpack.c.l.b16 %v213
    %v627 = vunpack.c.h.b16 %v213
    %v628 = vunpack.c.l.b16 %v214
    %v629 = vunpack.c.h.b16 %v214
    %v630 = vunpack.c.l.b16 %v215
    %v631 = vunpack.c.h.b16 %v215
    %v632 = vunpack.c.l.b16 %v216
    %v633 = vunpack.c.h.b16 %v216
    %v634 = vunpack.c.l.b16 %v217
    %v635 = vunpack.c.h.b16 %v217
    %v636 = vunpack.c.l.b16 %v218
    %v637 = vunpack.c.h.b16 %v218
    %v638 = vunpack.c.l.b16 %v219
    %v639 = vunpack.c.h.b16 %v219
    %v640 = vunpack.c.l.b16 %v220
    %v641 = vunpack.c.h.b16 %v220
    %v642 = vunpack.c.l.b16 %v221
    %v643 = vunpack.c.h.b16 %v221
    %v644 = vunpack.c.l.b16 %v222
    %v645 = vunpack.c.h.b16 %v222
    %v646 = vunpack.c.l.b16 %v223
    %v647 = vunpack.c.h.b16 %v223
    %v648 = vunpack.c.l.b16 %v224
    %v649 = vunpack.c.h.b16 %v224
    %v650 = vunpack.c.l.b16 %v225
    %v651 = vunpack.c.h.b16 %v225
    %v652 = vpack.c.b16 %v400, %v396
    %v653 = vpack.c.b16 %v401, %v397
    %v654 = vpack.c.b16 %v402, %v398
    %v655 = vpack.c.b16 %v403, %v399
    %v656 = vpack.c.b16 %v408, %v404
    %v657 = vpack.c.b16 %v409, %v405
    %v658 = vpack.c.b16 %v410, %v406
    %v659 = vpack.c.b16 %v411, %v407
    %v660 = vpack.c.b16 %v416, %v412
    %v661 = vpack.c.b16 %v417, %v413
    %v662 = vpack.c.b16 %v418, %v414
    %v663 = vpack.c.b16 %v419, %v415
    %v664 = vpack.c.b16 %v424, %v420
    %v665 = vpack.c.b16 %v425, %v421
    %v666 = vpack.c.b16 %v426, %v422
    %v667 = vpack.c.b16 %v427, %v423
    %v668 = vpack.c.b16 %v432, %v428
    %v669 = vpack.c.b16 %v433, %v429
    %v670 = vpack.c.b16 %v434, %v430
    %v671 = vpack.c.b16 %v435, %v431
    %v672 = vpack.c.b16 %v440, %v436
    %v673 = vpack.c.b16 %v441, %v437
    %v674 = vpack.c.b16 %v442, %v438
    %v675 = vpack.c.b16 %v443, %v439
    %v676 = vpack.c.b16 %v448, %v444
    %v677 = vpack.c.b16 %v449, %v445
    %v678 = vpack.c.b16 %v450, %v446
    %v679 = vpack.c.b16 %v451, %v447
    %v680 = vpack.c.b16 %v456, %v452
    %v681 = vpack.c.b16 %v457, %v453
    %v682 = vpack.c.b16 %v458, %v454
    %v683 = vpack.c.b16 %v459, %v455
    %v684 = vpack.c.b16 %v464, %v460
    %v685 = vpack.c.b16 %v465, %v461
    %v686 = vpack.c.b16 %v466, %v462
    %v687 = vpack.c.b16 %v467, %v463
    %v688 = vpack.c.b16 %v472, %v468
    %v689 = vpack.c.b16 %v473, %v469
    %v690 = vpack.c.b16 %v474, %v470
    %v691 = vpack.c.b16 %v475, %v471
    %v692 = vpack.c.b16 %v480, %v476
    %v693 = vpack.c.b16 %v481, %v477
    %v694 = vpack.c.b16 %v482, %v478
    %v695 = vpack.c.b16 %v483, %v479
    %v696 = vpack.c.b16 %v488, %v484
    %v697 = vpack.c.b16 %v489, %v485
    %v698 = vpack.c.b16 %v490, %v486
    %v699 = vpack.c.b16 %v491, %v487
    %v700 = vpack.c.b16 %v496, %v492
    %v701 = vpack.c.b16 %v497, %v493
    %v702 = vpack.c.b16 %v498, %v494
    %v703 = vpack.c.b16 %v499, %v495
    %v704 = vpack.c.b16 %v504, %v500
    %v705 = vpack.c.b16 %v505, %v501
    %v706 = vpack.c.b16 %v506, %v502
    %v707 = vpack.c.b16 %v507, %v503
    %v708 = vpack.c.b16 %v512, %v508
    %v709 = vpack.c.b16 %v513, %v509
    %v710 = vpack.c.b16 %v514, %v510
    %v711 = vpack.c.b16 %v515, %v511
    %v712 = vpack.c.b16 %v520, %v516
    %v713 = vpack.c.b16 %v521, %v517
    %v714 = vpack.c.b16 %v522, %v518
    %v715 = vpack.c.b16 %v523, %v519
    %v716 = vpack.c.b16 %v528, %v524
    %v717 = vpack.c.b16 %v529, %v525
    %v718 = vpack.c.b16 %v530, %v526
    %v719 = vpack.c.b16 %v531, %v527
    %v720 = vpack.c.b16 %v536, %v532
    %v721 = vpack.c.b16 %v537, %v533
    %v722 = vpack.c.b16 %v538, %v534
    %v723 = vpack.c.b16 %v539, %v535
    %v724 = vpack.c.b16 %v544, %v540
    %v725 = vpack.c.b16 %v545, %v541
    %v726 = vpack.c.b16 %v546, %v542
    %v727 = vpack.c.b16 %v547, %v543
    %v728 = vpack.c.b16 %v552, %v548
    %v729 = vpack.c.b16 %v553, %v549
    %v730 = vpack.c.b16 %v554, %v550
    %v731 = vpack.c.b16 %v555, %v551
    %v732 = vpack.c.b16 %v560, %v556
    %v733 = vpack.c.b16 %v561, %v557
    %v734 = vpack.c.b16 %v562, %v558
    %v735 = vpack.c.b16 %v563, %v559
    %v736 = vpack.c.b16 %v568, %v564
    %v737 = vpack.c.b16 %v569, %v565
    %v738 = vpack.c.b16 %v570, %v566
    %v739 = vpack.c.b16 %v571, %v567
    %v740 = vpack.c.b16 %v576, %v572
    %v741 = vpack.c.b16 %v577, %v573
    %v742 = vpack.c.b16 %v578, %v574
    %v743 = vpack.c.b16 %v579, %v575
    %v744 = vpack.c.b16 %v584, %v580
    %v745 = vpack.c.b16 %v585, %v581
    %v746 = vpack.c.b16 %v586, %v582
    %v747 = vpack.c.b16 %v587, %v583
    %v748 = vpack.c.b16 %v592, %v588
    %v749 = vpack.c.b16 %v593, %v589
    %v750 = vpack.c.b16 %v594, %v590
    %v751 = vpack.c.b16 %v595, %v591
    %v752 = vpack.c.b16 %v600, %v596
    %v753 = vpack.c.b16 %v601, %v597
    %v754 = vpack.c.b16 %v602, %v598
    %v755 = vpack.c.b16 %v603, %v599
    %v756 = vpack.c.b16 %v608, %v604
    %v757 = vpack.c.b16 %v609, %v605
    %v758 = vpack.c.b16 %v610, %v606
    %v759 = vpack.c.b16 %v611, %v607
    %v760 = vpack.c.b16 %v616, %v612
    %v761 = vpack.c.b16 %v617, %v613
    %v762 = vpack.c.b16 %v618, %v614
    %v763 = vpack.c.b16 %v619, %v615
    %v764 = vpack.c.b16 %v624, %v620
    %v765 = vpack.c.b16 %v625, %v621
    %v766 = vpack.c.b16 %v626, %v622
    %v767 = vpack.c.b16 %v627, %v623
    %v768 = vpack.c.b16 %v632, %v628
    %v769 = vpack.c.b16 %v633, %v629
    %v770 = vpack.c.b16 %v634, %v630
    %v771 = vpack.c.b16 %v635, %v631
    %v772 = vpack.c.b16 %v640, %v636
    %v773 = vpack.c.b16 %v641, %v637
    %v774 = vpack.c.b16 %v642, %v638
    %v775 = vpack.c.b16 %v643, %v639
    %v776 = vpack.c.b16 %v648, %v644
    %v777 = vpack.c.b16 %v649, %v645
    %v778 = vpack.c.b16 %v650, %v646
    %v779 = vpack.c.b16 %v651, %v647
    %908 = vmatprep.subr.bf16.mxu0 %v653
    %909 = vmatpush1.bf16.msra.mxu0 %v652
    %910 = vmatprep.subr.bf16.mxu0 %v657
    %911 = vmatpush1.bf16.msra.mxu0 %v656
    %912 = vmatprep.subr.bf16.mxu0 %v661
    %913 = vmatpush1.bf16.msra.mxu0 %v660
    %914 = vmatprep.subr.bf16.mxu0 %v665
    %915 = vmatpush1.bf16.msra.mxu0 %v664
    %916 = vmatprep.subr.bf16.mxu0 %v669
    %917 = vmatpush1.bf16.msra.mxu0 %v668
    %918 = vmatprep.subr.bf16.mxu0 %v673
    %919 = vmatpush1.bf16.msra.mxu0 %v672
    %920 = vmatprep.subr.bf16.mxu0 %v677
    %921 = vmatpush1.bf16.msra.mxu0 %v676
    %922 = vmatprep.subr.bf16.mxu0 %v681
    %923 = vmatpush1.bf16.msra.mxu0 %v680
    %924 = vmatprep.subr.bf16.mxu0 %v685
    %925 = vmatpush1.bf16.msra.mxu0 %v684
    %926 = vmatprep.subr.bf16.mxu0 %v689
    %927 = vmatpush1.bf16.msra.mxu0 %v688
    %928 = vmatprep.subr.bf16.mxu0 %v693
    %929 = vmatpush1.bf16.msra.mxu0 %v692
    %930 = vmatprep.subr.bf16.mxu0 %v697
    %931 = vmatpush1.bf16.msra.mxu0 %v696
    %932 = vmatprep.subr.bf16.mxu0 %v701
    %933 = vmatpush1.bf16.msra.mxu0 %v700
    %934 = vmatprep.subr.bf16.mxu0 %v705
    %935 = vmatpush1.bf16.msra.mxu0 %v704
    %936 = vmatprep.subr.bf16.mxu0 %v709
    %937 = vmatpush1.bf16.msra.mxu0 %v708
    %938 = vmatprep.subr.bf16.mxu0 %v713
    %939 = vmatpush1.bf16.msra.mxu0 %v712
    %940 = vmatprep.mubr.bf16.mxu0 %v261
    %941 = vmatmul.mubr.bf16.gmra.mrb[0].mxu0 %v260
    %v942 = vpop.f32.mrb[0].mxu0
    %v943 = vadd.f32 %v231, %v942
    %v944 = vpop.f32.mrb[0].mxu0
    %v945 = vadd.f32 %v235, %v944
    %v946 = vpop.f32.mrb[0].mxu0
    %v947 = vadd.f32 %v231, %v946
    %v948 = vpop.f32.mrb[0].mxu0
    %v949 = vadd.f32 %v235, %v948
    %950 = vdwg.mxu0
    %951 = vmatprep.subr.bf16.mxu0 %v717
    %952 = vmatpush1.bf16.msra.mxu0 %v716
    %953 = vmatprep.subr.bf16.mxu0 %v721
    %954 = vmatpush1.bf16.msra.mxu0 %v720
    %955 = vmatprep.subr.bf16.mxu0 %v725
    %956 = vmatpush1.bf16.msra.mxu0 %v724
    %957 = vmatprep.subr.bf16.mxu0 %v729
    %958 = vmatpush1.bf16.msra.mxu0 %v728
    %959 = vmatprep.subr.bf16.mxu0 %v733
    %960 = vmatpush1.bf16.msra.mxu0 %v732
    %961 = vmatprep.subr.bf16.mxu0 %v737
    %962 = vmatpush1.bf16.msra.mxu0 %v736
    %963 = vmatprep.subr.bf16.mxu0 %v741
    %964 = vmatpush1.bf16.msra.mxu0 %v740
    %965 = vmatprep.subr.bf16.mxu0 %v745
    %966 = vmatpush1.bf16.msra.mxu0 %v744
    %967 = vmatprep.subr.bf16.mxu0 %v749
    %968 = vmatpush1.bf16.msra.mxu0 %v748
    %969 = vmatprep.subr.bf16.mxu0 %v753
    %970 = vmatpush1.bf16.msra.mxu0 %v752
    %971 = vmatprep.subr.bf16.mxu0 %v757
    %972 = vmatpush1.bf16.msra.mxu0 %v756
    %973 = vmatprep.subr.bf16.mxu0 %v761
    %974 = vmatpush1.bf16.msra.mxu0 %v760
    %975 = vmatprep.subr.bf16.mxu0 %v765
    %976 = vmatpush1.bf16.msra.mxu0 %v764
    %977 = vmatprep.subr.bf16.mxu0 %v769
    %978 = vmatpush1.bf16.msra.mxu0 %v768
    %979 = vmatprep.subr.bf16.mxu0 %v773
    %980 = vmatpush1.bf16.msra.mxu0 %v772
    %981 = vmatprep.subr.bf16.mxu0 %v777
    %982 = vmatpush1.bf16.msra.mxu0 %v776
    %983 = vmatprep.mubr.bf16.mxu0 %v263
    %984 = vmatmul.mubr.bf16.gmra.mrb[0].mxu0 %v262
    %v985 = vpop.f32.mrb[0].mxu0
    %v986 = vadd.f32 %v943, %v985
    %v987 = vpop.f32.mrb[0].mxu0
    %v988 = vadd.f32 %v945, %v987
    %v989 = vpop.f32.mrb[0].mxu0
    %v990 = vadd.f32 %v947, %v989
    %v991 = vpop.f32.mrb[0].mxu0
    %v992 = vadd.f32 %v949, %v991
    %993 = vdwg.mxu0
    %994 = vmatprep.subr.bf16.mxu0 %v655
    %995 = vmatpush1.bf16.msra.mxu0 %v654
    %996 = vmatprep.subr.bf16.mxu0 %v659
    %997 = vmatpush1.bf16.msra.mxu0 %v658
    %998 = vmatprep.subr.bf16.mxu0 %v663
    %999 = vmatpush1.bf16.msra.mxu0 %v662
    %1000 = vmatprep.subr.bf16.mxu0 %v667
    %1001 = vmatpush1.bf16.msra.mxu0 %v666
    %1002 = vmatprep.subr.bf16.mxu0 %v671
    %1003 = vmatpush1.bf16.msra.mxu0 %v670
    %1004 = vmatprep.subr.bf16.mxu0 %v675
    %1005 = vmatpush1.bf16.msra.mxu0 %v674
    %1006 = vmatprep.subr.bf16.mxu0 %v679
    %1007 = vmatpush1.bf16.msra.mxu0 %v678
    %1008 = vmatprep.subr.bf16.mxu0 %v683
    %1009 = vmatpush1.bf16.msra.mxu0 %v682
    %1010 = vmatprep.subr.bf16.mxu0 %v687
    %1011 = vmatpush1.bf16.msra.mxu0 %v686
    %1012 = vmatprep.subr.bf16.mxu0 %v691
    %1013 = vmatpush1.bf16.msra.mxu0 %v690
    %1014 = vmatprep.subr.bf16.mxu0 %v695
    %1015 = vmatpush1.bf16.msra.mxu0 %v694
    %1016 = vmatprep.subr.bf16.mxu0 %v699
    %1017 = vmatpush1.bf16.msra.mxu0 %v698
    %1018 = vmatprep.subr.bf16.mxu0 %v703
    %1019 = vmatpush1.bf16.msra.mxu0 %v702
    %1020 = vmatprep.subr.bf16.mxu0 %v707
    %1021 = vmatpush1.bf16.msra.mxu0 %v706
    %1022 = vmatprep.subr.bf16.mxu0 %v711
    %1023 = vmatpush1.bf16.msra.mxu0 %v710
    %1024 = vmatprep.subr.bf16.mxu0 %v715
    %1025 = vmatpush1.bf16.msra.mxu0 %v714
    %1026 = vmatprep.mubr.bf16.mxu0 %v261
    %1027 = vmatmul.mubr.bf16.gmra.mrb[0].mxu0 %v260
    %v1028 = vpop.f32.mrb[0].mxu0
    %v1029 = vadd.f32 %v239, %v1028
    %v1030 = vpop.f32.mrb[0].mxu0
    %v1031 = vadd.f32 %v243, %v1030
    %v1032 = vpop.f32.mrb[0].mxu0
    %v1033 = vadd.f32 %v239, %v1032
    %v1034 = vpop.f32.mrb[0].mxu0
    %v1035 = vadd.f32 %v243, %v1034
    %1036 = vdwg.mxu0
    %1037 = vmatprep.subr.bf16.mxu0 %v719
    %1038 = vmatpush1.bf16.msra.mxu0 %v718
    %1039 = vmatprep.subr.bf16.mxu0 %v723
    %1040 = vmatpush1.bf16.msra.mxu0 %v722
    %1041 = vmatprep.subr.bf16.mxu0 %v727
    %1042 = vmatpush1.bf16.msra.mxu0 %v726
    %1043 = vmatprep.subr.bf16.mxu0 %v731
    %1044 = vmatpush1.bf16.msra.mxu0 %v730
    %1045 = vmatprep.subr.bf16.mxu0 %v735
    %1046 = vmatpush1.bf16.msra.mxu0 %v734
    %1047 = vmatprep.subr.bf16.mxu0 %v739
    %1048 = vmatpush1.bf16.msra.mxu0 %v738
    %1049 = vmatprep.subr.bf16.mxu0 %v743
    %1050 = vmatpush1.bf16.msra.mxu0 %v742
    %1051 = vmatprep.subr.bf16.mxu0 %v747
    %1052 = vmatpush1.bf16.msra.mxu0 %v746
    %1053 = vmatprep.subr.bf16.mxu0 %v751
    %1054 = vmatpush1.bf16.msra.mxu0 %v750
    %1055 = vmatprep.subr.bf16.mxu0 %v755
    %1056 = vmatpush1.bf16.msra.mxu0 %v754
    %1057 = vmatprep.subr.bf16.mxu0 %v759
    %1058 = vmatpush1.bf16.msra.mxu0 %v758
    %1059 = vmatprep.subr.bf16.mxu0 %v763
    %1060 = vmatpush1.bf16.msra.mxu0 %v762
    %1061 = vmatprep.subr.bf16.mxu0 %v767
    %1062 = vmatpush1.bf16.msra.mxu0 %v766
    %1063 = vmatprep.subr.bf16.mxu0 %v771
    %1064 = vmatpush1.bf16.msra.mxu0 %v770
    %1065 = vmatprep.subr.bf16.mxu0 %v775
    %1066 = vmatpush1.bf16.msra.mxu0 %v774
    %1067 = vmatprep.subr.bf16.mxu0 %v779
    %1068 = vmatpush1.bf16.msra.mxu0 %v778
    %1069 = vmatprep.mubr.bf16.mxu0 %v263
    %1070 = vmatmul.mubr.bf16.gmra.mrb[0].mxu0 %v262
    %v1071 = vpop.f32.mrb[0].mxu0
    %v1072 = vadd.f32 %v1029, %v1071
    %v1073 = vpop.f32.mrb[0].mxu0
    %v1074 = vadd.f32 %v1031, %v1073
    %v1075 = vpop.f32.mrb[0].mxu0
    %v1076 = vadd.f32 %v1033, %v1075
    %v1077 = vpop.f32.mrb[0].mxu0
    %v1078 = vadd.f32 %v1035, %v1077
    %1079 = vdwg.mxu0
    %v1080 = vmax.f32 %v986, 0.0
    %v1081 = vmax.f32 %v988, 0.0
    %v1082 = vmax.f32 %v1072, 0.0
    %v1083 = vmax.f32 %v1074, 0.0
    %v1084 = vmax.f32 %v990, 0.0
    %v1085 = vmax.f32 %v992, 0.0
    %v1086 = vmax.f32 %v1076, 0.0
    %v1087 = vmax.f32 %v1078, 0.0
    %v1088 = vpack.c.bf16 %v1084, %v1080
    %v1089 = vpack.c.bf16 %v1085, %v1081
    %v1090 = vpack.c.bf16 %v1086, %v1082
    %v1091 = vpack.c.bf16 %v1087, %v1083
    %v1092 = vld [vmem:[%s1] sm:$0xff]
    %v1093 = vld [vmem:[%s1 + $0x8] sm:$0xff]
    %v1094 = vld [vmem:[%s1 + $0x10] sm:$0xff]
    %v1095 = vld [vmem:[%s1 + $0x18] sm:$0xff]
    %v1096 = vld [vmem:[#allocation4] sm:$0xff]
    %v1097 = vld [vmem:[#allocation4 + $0x8] sm:$0xff]
    %v1098 = vld [vmem:[#allocation4 + $0x10] sm:$0xff]
    %v1099 = vld [vmem:[#allocation4 + $0x18] sm:$0xff]
    %v1100 = vld [vmem:[#allocation4 + $0x20] sm:$0xff]
    %v1101 = vld [vmem:[#allocation4 + $0x28] sm:$0xff]
    %v1102 = vld [vmem:[#allocation4 + $0x30] sm:$0xff]
    %v1103 = vld [vmem:[#allocation4 + $0x38] sm:$0xff]
    %v1104 = vld [vmem:[#allocation4 + $0x40] sm:$0xff]
    %v1105 = vld [vmem:[#allocation4 + $0x48] sm:$0xff]
    %v1106 = vld [vmem:[#allocation4 + $0x50] sm:$0xff]
    %v1107 = vld [vmem:[#allocation4 + $0x58] sm:$0xff]
    %v1108 = vld [vmem:[#allocation4 + $0x60] sm:$0xff]
    %v1109 = vld [vmem:[#allocation4 + $0x68] sm:$0xff]
    %v1110 = vld [vmem:[#allocation4 + $0x70] sm:$0xff]
    %v1111 = vld [vmem:[#allocation4 + $0x78] sm:$0xff]
    %v1112 = vld [vmem:[#allocation4 + $0x80] sm:$0xff]
    %v1113 = vld [vmem:[#allocation4 + $0x88] sm:$0xff]
    %v1114 = vld [vmem:[#allocation4 + $0x90] sm:$0xff]
    %v1115 = vld [vmem:[#allocation4 + $0x98] sm:$0xff]
    %v1116 = vld [vmem:[#allocation4 + $0xa0] sm:$0xff]
    %v1117 = vld [vmem:[#allocation4 + $0xa8] sm:$0xff]
    %v1118 = vld [vmem:[#allocation4 + $0xb0] sm:$0xff]
    %v1119 = vld [vmem:[#allocation4 + $0xb8] sm:$0xff]
    %v1120 = vld [vmem:[#allocation4 + $0xc0] sm:$0xff]
    %v1121 = vld [vmem:[#allocation4 + $0xc8] sm:$0xff]
    %v1122 = vld [vmem:[#allocation4 + $0xd0] sm:$0xff]
    %v1123 = vld [vmem:[#allocation4 + $0xd8] sm:$0xff]
    %v1124 = vld [vmem:[#allocation4 + $0xe0] sm:$0xff]
    %v1125 = vld [vmem:[#allocation4 + $0xe8] sm:$0xff]
    %v1126 = vld [vmem:[#allocation4 + $0xf0] sm:$0xff]
    %v1127 = vld [vmem:[#allocation4 + $0xf8] sm:$0xff]
    %v1128 = vld [vmem:[#allocation4 + $0x100] sm:$0xff]
    %v1129 = vld [vmem:[#allocation4 + $0x108] sm:$0xff]
    %v1130 = vld [vmem:[#allocation4 + $0x110] sm:$0xff]
    %v1131 = vld [vmem:[#allocation4 + $0x118] sm:$0xff]
    %v1132 = vld [vmem:[#allocation4 + $0x120] sm:$0xff]
    %v1133 = vld [vmem:[#allocation4 + $0x128] sm:$0xff]
    %v1134 = vld [vmem:[#allocation4 + $0x130] sm:$0xff]
    %v1135 = vld [vmem:[#allocation4 + $0x138] sm:$0xff]
    %v1136 = vld [vmem:[#allocation4 + $0x140] sm:$0xff]
    %v1137 = vld [vmem:[#allocation4 + $0x148] sm:$0xff]
    %v1138 = vld [vmem:[#allocation4 + $0x150] sm:$0xff]
    %v1139 = vld [vmem:[#allocation4 + $0x158] sm:$0xff]
    %v1140 = vld [vmem:[#allocation4 + $0x160] sm:$0xff]
    %v1141 = vld [vmem:[#allocation4 + $0x168] sm:$0xff]
    %v1142 = vld [vmem:[#allocation4 + $0x170] sm:$0xff]
    %v1143 = vld [vmem:[#allocation4 + $0x178] sm:$0xff]
    %v1144 = vld [vmem:[#allocation4 + $0x180] sm:$0xff]
    %v1145 = vld [vmem:[#allocation4 + $0x188] sm:$0xff]
    %v1146 = vld [vmem:[#allocation4 + $0x190] sm:$0xff]
    %v1147 = vld [vmem:[#allocation4 + $0x198] sm:$0xff]
    %v1148 = vld [vmem:[#allocation4 + $0x1a0] sm:$0xff]
    %v1149 = vld [vmem:[#allocation4 + $0x1a8] sm:$0xff]
    %v1150 = vld [vmem:[#allocation4 + $0x1b0] sm:$0xff]
    %v1151 = vld [vmem:[#allocation4 + $0x1b8] sm:$0xff]
    %v1152 = vld [vmem:[#allocation4 + $0x1c0] sm:$0xff]
    %v1153 = vld [vmem:[#allocation4 + $0x1c8] sm:$0xff]
    %v1154 = vld [vmem:[#allocation4 + $0x1d0] sm:$0xff]
    %v1155 = vld [vmem:[#allocation4 + $0x1d8] sm:$0xff]
    %v1156 = vld [vmem:[#allocation4 + $0x1e0] sm:$0xff]
    %v1157 = vld [vmem:[#allocation4 + $0x1e8] sm:$0xff]
    %v1158 = vld [vmem:[#allocation4 + $0x1f0] sm:$0xff]
    %v1159 = vld [vmem:[#allocation4 + $0x1f8] sm:$0xff]
    %v1160 = vld [vmem:[#allocation4 + $0x200] sm:$0xff]
    %v1161 = vld [vmem:[#allocation4 + $0x208] sm:$0xff]
    %v1162 = vld [vmem:[#allocation4 + $0x210] sm:$0xff]
    %v1163 = vld [vmem:[#allocation4 + $0x218] sm:$0xff]
    %v1164 = vld [vmem:[#allocation4 + $0x220] sm:$0xff]
    %v1165 = vld [vmem:[#allocation4 + $0x228] sm:$0xff]
    %v1166 = vld [vmem:[#allocation4 + $0x230] sm:$0xff]
    %v1167 = vld [vmem:[#allocation4 + $0x238] sm:$0xff]
    %v1168 = vld [vmem:[#allocation4 + $0x240] sm:$0xff]
    %v1169 = vld [vmem:[#allocation4 + $0x248] sm:$0xff]
    %v1170 = vld [vmem:[#allocation4 + $0x250] sm:$0xff]
    %v1171 = vld [vmem:[#allocation4 + $0x258] sm:$0xff]
    %v1172 = vld [vmem:[#allocation4 + $0x260] sm:$0xff]
    %v1173 = vld [vmem:[#allocation4 + $0x268] sm:$0xff]
    %v1174 = vld [vmem:[#allocation4 + $0x270] sm:$0xff]
    %v1175 = vld [vmem:[#allocation4 + $0x278] sm:$0xff]
    %v1176 = vld [vmem:[#allocation4 + $0x280] sm:$0xff]
    %v1177 = vld [vmem:[#allocation4 + $0x288] sm:$0xff]
    %v1178 = vld [vmem:[#allocation4 + $0x290] sm:$0xff]
    %v1179 = vld [vmem:[#allocation4 + $0x298] sm:$0xff]
    %v1180 = vld [vmem:[#allocation4 + $0x2a0] sm:$0xff]
    %v1181 = vld [vmem:[#allocation4 + $0x2a8] sm:$0xff]
    %v1182 = vld [vmem:[#allocation4 + $0x2b0] sm:$0xff]
    %v1183 = vld [vmem:[#allocation4 + $0x2b8] sm:$0xff]
    %v1184 = vld [vmem:[#allocation4 + $0x2c0] sm:$0xff]
    %v1185 = vld [vmem:[#allocation4 + $0x2c8] sm:$0xff]
    %v1186 = vld [vmem:[#allocation4 + $0x2d0] sm:$0xff]
    %v1187 = vld [vmem:[#allocation4 + $0x2d8] sm:$0xff]
    %v1188 = vld [vmem:[#allocation4 + $0x2e0] sm:$0xff]
    %v1189 = vld [vmem:[#allocation4 + $0x2e8] sm:$0xff]
    %v1190 = vld [vmem:[#allocation4 + $0x2f0] sm:$0xff]
    %v1191 = vld [vmem:[#allocation4 + $0x2f8] sm:$0xff]
    %v1192 = vld [vmem:[#allocation4 + $0x300] sm:$0xff]
    %v1193 = vld [vmem:[#allocation4 + $0x308] sm:$0xff]
    %v1194 = vld [vmem:[#allocation4 + $0x310] sm:$0xff]
    %v1195 = vld [vmem:[#allocation4 + $0x318] sm:$0xff]
    %v1196 = vld [vmem:[#allocation4 + $0x320] sm:$0xff]
    %v1197 = vld [vmem:[#allocation4 + $0x328] sm:$0xff]
    %v1198 = vld [vmem:[#allocation4 + $0x330] sm:$0xff]
    %v1199 = vld [vmem:[#allocation4 + $0x338] sm:$0xff]
    %v1200 = vld [vmem:[#allocation4 + $0x340] sm:$0xff]
    %v1201 = vld [vmem:[#allocation4 + $0x348] sm:$0xff]
    %v1202 = vld [vmem:[#allocation4 + $0x350] sm:$0xff]
    %v1203 = vld [vmem:[#allocation4 + $0x358] sm:$0xff]
    %v1204 = vld [vmem:[#allocation4 + $0x360] sm:$0xff]
    %v1205 = vld [vmem:[#allocation4 + $0x368] sm:$0xff]
    %v1206 = vld [vmem:[#allocation4 + $0x370] sm:$0xff]
    %v1207 = vld [vmem:[#allocation4 + $0x378] sm:$0xff]
    %v1208 = vld [vmem:[#allocation4 + $0x380] sm:$0xff]
    %v1209 = vld [vmem:[#allocation4 + $0x388] sm:$0xff]
    %v1210 = vld [vmem:[#allocation4 + $0x390] sm:$0xff]
    %v1211 = vld [vmem:[#allocation4 + $0x398] sm:$0xff]
    %v1212 = vld [vmem:[#allocation4 + $0x3a0] sm:$0xff]
    %v1213 = vld [vmem:[#allocation4 + $0x3a8] sm:$0xff]
    %v1214 = vld [vmem:[#allocation4 + $0x3b0] sm:$0xff]
    %v1215 = vld [vmem:[#allocation4 + $0x3b8] sm:$0xff]
    %v1216 = vld [vmem:[#allocation4 + $0x3c0] sm:$0xff]
    %v1217 = vld [vmem:[#allocation4 + $0x3c8] sm:$0xff]
    %v1218 = vld [vmem:[#allocation4 + $0x3d0] sm:$0xff]
    %v1219 = vld [vmem:[#allocation4 + $0x3d8] sm:$0xff]
    %v1220 = vld [vmem:[#allocation4 + $0x3e0] sm:$0xff]
    %v1221 = vld [vmem:[#allocation4 + $0x3e8] sm:$0xff]
    %v1222 = vld [vmem:[#allocation4 + $0x3f0] sm:$0xff]
    %v1223 = vld [vmem:[#allocation4 + $0x3f8] sm:$0xff]
    %v1224 = vld [vmem:[%s5] sm:$0xf]
    %v1226 = vlaneseq
    %v1227 = vshrl.u32 %v1226, 7
    %v1228 = vsub.s32 0, %v1227
    %v1229 = vrot.slane %v1224, %v1228
    %v1230 = vlaneseq
    %v1231 = vshrl.u32 %v1230, 7
    %v1232 = vsub.s32 1, %v1231
    %v1233 = vrot.slane %v1224, %v1232
    %v1234 = vlaneseq
    %v1235 = vshrl.u32 %v1234, 7
    %v1236 = vsub.s32 2, %v1235
    %v1237 = vrot.slane %v1224, %v1236
    %v1238 = vlaneseq
    %v1239 = vshrl.u32 %v1238, 7
    %v1240 = vsub.s32 3, %v1239
    %v1241 = vrot.slane %v1224, %v1240
    %v1250 = vunpack.c.l.b16 %v1092
    %v1251 = vunpack.c.h.b16 %v1092
    %v1252 = vunpack.c.l.b16 %v1093
    %v1253 = vunpack.c.h.b16 %v1093
    %v1254 = vunpack.c.l.b16 %v1094
    %v1255 = vunpack.c.h.b16 %v1094
    %v1256 = vunpack.c.l.b16 %v1095
    %v1257 = vunpack.c.h.b16 %v1095
    %v1258 = vpack.c.b16 %v1254, %v1250
    %v1259 = vpack.c.b16 %v1255, %v1251
    %v1260 = vpack.c.b16 %v1256, %v1252
    %v1261 = vpack.c.b16 %v1257, %v1253
    %v1394 = vunpack.c.l.b16 %v1096
    %v1395 = vunpack.c.h.b16 %v1096
    %v1396 = vunpack.c.l.b16 %v1097
    %v1397 = vunpack.c.h.b16 %v1097
    %v1398 = vunpack.c.l.b16 %v1098
    %v1399 = vunpack.c.h.b16 %v1098
    %v1400 = vunpack.c.l.b16 %v1099
    %v1401 = vunpack.c.h.b16 %v1099
    %v1402 = vunpack.c.l.b16 %v1100
    %v1403 = vunpack.c.h.b16 %v1100
    %v1404 = vunpack.c.l.b16 %v1101
    %v1405 = vunpack.c.h.b16 %v1101
    %v1406 = vunpack.c.l.b16 %v1102
    %v1407 = vunpack.c.h.b16 %v1102
    %v1408 = vunpack.c.l.b16 %v1103
    %v1409 = vunpack.c.h.b16 %v1103
    %v1410 = vunpack.c.l.b16 %v1104
    %v1411 = vunpack.c.h.b16 %v1104
    %v1412 = vunpack.c.l.b16 %v1105
    %v1413 = vunpack.c.h.b16 %v1105
    %v1414 = vunpack.c.l.b16 %v1106
    %v1415 = vunpack.c.h.b16 %v1106
    %v1416 = vunpack.c.l.b16 %v1107
    %v1417 = vunpack.c.h.b16 %v1107
    %v1418 = vunpack.c.l.b16 %v1108
    %v1419 = vunpack.c.h.b16 %v1108
    %v1420 = vunpack.c.l.b16 %v1109
    %v1421 = vunpack.c.h.b16 %v1109
    %v1422 = vunpack.c.l.b16 %v1110
    %v1423 = vunpack.c.h.b16 %v1110
    %v1424 = vunpack.c.l.b16 %v1111
    %v1425 = vunpack.c.h.b16 %v1111
    %v1426 = vunpack.c.l.b16 %v1112
    %v1427 = vunpack.c.h.b16 %v1112
    %v1428 = vunpack.c.l.b16 %v1113
    %v1429 = vunpack.c.h.b16 %v1113
    %v1430 = vunpack.c.l.b16 %v1114
    %v1431 = vunpack.c.h.b16 %v1114
    %v1432 = vunpack.c.l.b16 %v1115
    %v1433 = vunpack.c.h.b16 %v1115
    %v1434 = vunpack.c.l.b16 %v1116
    %v1435 = vunpack.c.h.b16 %v1116
    %v1436 = vunpack.c.l.b16 %v1117
    %v1437 = vunpack.c.h.b16 %v1117
    %v1438 = vunpack.c.l.b16 %v1118
    %v1439 = vunpack.c.h.b16 %v1118
    %v1440 = vunpack.c.l.b16 %v1119
    %v1441 = vunpack.c.h.b16 %v1119
    %v1442 = vunpack.c.l.b16 %v1120
    %v1443 = vunpack.c.h.b16 %v1120
    %v1444 = vunpack.c.l.b16 %v1121
    %v1445 = vunpack.c.h.b16 %v1121
    %v1446 = vunpack.c.l.b16 %v1122
    %v1447 = vunpack.c.h.b16 %v1122
    %v1448 = vunpack.c.l.b16 %v1123
    %v1449 = vunpack.c.h.b16 %v1123
    %v1450 = vunpack.c.l.b16 %v1124
    %v1451 = vunpack.c.h.b16 %v1124
    %v1452 = vunpack.c.l.b16 %v1125
    %v1453 = vunpack.c.h.b16 %v1125
    %v1454 = vunpack.c.l.b16 %v1126
    %v1455 = vunpack.c.h.b16 %v1126
    %v1456 = vunpack.c.l.b16 %v1127
    %v1457 = vunpack.c.h.b16 %v1127
    %v1458 = vunpack.c.l.b16 %v1128
    %v1459 = vunpack.c.h.b16 %v1128
    %v1460 = vunpack.c.l.b16 %v1129
    %v1461 = vunpack.c.h.b16 %v1129
    %v1462 = vunpack.c.l.b16 %v1130
    %v1463 = vunpack.c.h.b16 %v1130
    %v1464 = vunpack.c.l.b16 %v1131
    %v1465 = vunpack.c.h.b16 %v1131
    %v1466 = vunpack.c.l.b16 %v1132
    %v1467 = vunpack.c.h.b16 %v1132
    %v1468 = vunpack.c.l.b16 %v1133
    %v1469 = vunpack.c.h.b16 %v1133
    %v1470 = vunpack.c.l.b16 %v1134
    %v1471 = vunpack.c.h.b16 %v1134
    %v1472 = vunpack.c.l.b16 %v1135
    %v1473 = vunpack.c.h.b16 %v1135
    %v1474 = vunpack.c.l.b16 %v1136
    %v1475 = vunpack.c.h.b16 %v1136
    %v1476 = vunpack.c.l.b16 %v1137
    %v1477 = vunpack.c.h.b16 %v1137
    %v1478 = vunpack.c.l.b16 %v1138
    %v1479 = vunpack.c.h.b16 %v1138
    %v1480 = vunpack.c.l.b16 %v1139
    %v1481 = vunpack.c.h.b16 %v1139
    %v1482 = vunpack.c.l.b16 %v1140
    %v1483 = vunpack.c.h.b16 %v1140
    %v1484 = vunpack.c.l.b16 %v1141
    %v1485 = vunpack.c.h.b16 %v1141
    %v1486 = vunpack.c.l.b16 %v1142
    %v1487 = vunpack.c.h.b16 %v1142
    %v1488 = vunpack.c.l.b16 %v1143
    %v1489 = vunpack.c.h.b16 %v1143
    %v1490 = vunpack.c.l.b16 %v1144
    %v1491 = vunpack.c.h.b16 %v1144
    %v1492 = vunpack.c.l.b16 %v1145
    %v1493 = vunpack.c.h.b16 %v1145
    %v1494 = vunpack.c.l.b16 %v1146
    %v1495 = vunpack.c.h.b16 %v1146
    %v1496 = vunpack.c.l.b16 %v1147
    %v1497 = vunpack.c.h.b16 %v1147
    %v1498 = vunpack.c.l.b16 %v1148
    %v1499 = vunpack.c.h.b16 %v1148
    %v1500 = vunpack.c.l.b16 %v1149
    %v1501 = vunpack.c.h.b16 %v1149
    %v1502 = vunpack.c.l.b16 %v1150
    %v1503 = vunpack.c.h.b16 %v1150
    %v1504 = vunpack.c.l.b16 %v1151
    %v1505 = vunpack.c.h.b16 %v1151
    %v1506 = vunpack.c.l.b16 %v1152
    %v1507 = vunpack.c.h.b16 %v1152
    %v1508 = vunpack.c.l.b16 %v1153
    %v1509 = vunpack.c.h.b16 %v1153
    %v1510 = vunpack.c.l.b16 %v1154
    %v1511 = vunpack.c.h.b16 %v1154
    %v1512 = vunpack.c.l.b16 %v1155
    %v1513 = vunpack.c.h.b16 %v1155
    %v1514 = vunpack.c.l.b16 %v1156
    %v1515 = vunpack.c.h.b16 %v1156
    %v1516 = vunpack.c.l.b16 %v1157
    %v1517 = vunpack.c.h.b16 %v1157
    %v1518 = vunpack.c.l.b16 %v1158
    %v1519 = vunpack.c.h.b16 %v1158
    %v1520 = vunpack.c.l.b16 %v1159
    %v1521 = vunpack.c.h.b16 %v1159
    %v1522 = vunpack.c.l.b16 %v1160
    %v1523 = vunpack.c.h.b16 %v1160
    %v1524 = vunpack.c.l.b16 %v1161
    %v1525 = vunpack.c.h.b16 %v1161
    %v1526 = vunpack.c.l.b16 %v1162
    %v1527 = vunpack.c.h.b16 %v1162
    %v1528 = vunpack.c.l.b16 %v1163
    %v1529 = vunpack.c.h.b16 %v1163
    %v1530 = vunpack.c.l.b16 %v1164
    %v1531 = vunpack.c.h.b16 %v1164
    %v1532 = vunpack.c.l.b16 %v1165
    %v1533 = vunpack.c.h.b16 %v1165
    %v1534 = vunpack.c.l.b16 %v1166
    %v1535 = vunpack.c.h.b16 %v1166
    %v1536 = vunpack.c.l.b16 %v1167
    %v1537 = vunpack.c.h.b16 %v1167
    %v1538 = vunpack.c.l.b16 %v1168
    %v1539 = vunpack.c.h.b16 %v1168
    %v1540 = vunpack.c.l.b16 %v1169
    %v1541 = vunpack.c.h.b16 %v1169
    %v1542 = vunpack.c.l.b16 %v1170
    %v1543 = vunpack.c.h.b16 %v1170
    %v1544 = vunpack.c.l.b16 %v1171
    %v1545 = vunpack.c.h.b16 %v1171
    %v1546 = vunpack.c.l.b16 %v1172
    %v1547 = vunpack.c.h.b16 %v1172
    %v1548 = vunpack.c.l.b16 %v1173
    %v1549 = vunpack.c.h.b16 %v1173
    %v1550 = vunpack.c.l.b16 %v1174
    %v1551 = vunpack.c.h.b16 %v1174
    %v1552 = vunpack.c.l.b16 %v1175
    %v1553 = vunpack.c.h.b16 %v1175
    %v1554 = vunpack.c.l.b16 %v1176
    %v1555 = vunpack.c.h.b16 %v1176
    %v1556 = vunpack.c.l.b16 %v1177
    %v1557 = vunpack.c.h.b16 %v1177
    %v1558 = vunpack.c.l.b16 %v1178
    %v1559 = vunpack.c.h.b16 %v1178
    %v1560 = vunpack.c.l.b16 %v1179
    %v1561 = vunpack.c.h.b16 %v1179
    %v1562 = vunpack.c.l.b16 %v1180
    %v1563 = vunpack.c.h.b16 %v1180
    %v1564 = vunpack.c.l.b16 %v1181
    %v1565 = vunpack.c.h.b16 %v1181
    %v1566 = vunpack.c.l.b16 %v1182
    %v1567 = vunpack.c.h.b16 %v1182
    %v1568 = vunpack.c.l.b16 %v1183
    %v1569 = vunpack.c.h.b16 %v1183
    %v1570 = vunpack.c.l.b16 %v1184
    %v1571 = vunpack.c.h.b16 %v1184
    %v1572 = vunpack.c.l.b16 %v1185
    %v1573 = vunpack.c.h.b16 %v1185
    %v1574 = vunpack.c.l.b16 %v1186
    %v1575 = vunpack.c.h.b16 %v1186
    %v1576 = vunpack.c.l.b16 %v1187
    %v1577 = vunpack.c.h.b16 %v1187
    %v1578 = vunpack.c.l.b16 %v1188
    %v1579 = vunpack.c.h.b16 %v1188
    %v1580 = vunpack.c.l.b16 %v1189
    %v1581 = vunpack.c.h.b16 %v1189
    %v1582 = vunpack.c.l.b16 %v1190
    %v1583 = vunpack.c.h.b16 %v1190
    %v1584 = vunpack.c.l.b16 %v1191
    %v1585 = vunpack.c.h.b16 %v1191
    %v1586 = vunpack.c.l.b16 %v1192
    %v1587 = vunpack.c.h.b16 %v1192
    %v1588 = vunpack.c.l.b16 %v1193
    %v1589 = vunpack.c.h.b16 %v1193
    %v1590 = vunpack.c.l.b16 %v1194
    %v1591 = vunpack.c.h.b16 %v1194
    %v1592 = vunpack.c.l.b16 %v1195
    %v1593 = vunpack.c.h.b16 %v1195
    %v1594 = vunpack.c.l.b16 %v1196
    %v1595 = vunpack.c.h.b16 %v1196
    %v1596 = vunpack.c.l.b16 %v1197
    %v1597 = vunpack.c.h.b16 %v1197
    %v1598 = vunpack.c.l.b16 %v1198
    %v1599 = vunpack.c.h.b16 %v1198
    %v1600 = vunpack.c.l.b16 %v1199
    %v1601 = vunpack.c.h.b16 %v1199
    %v1602 = vunpack.c.l.b16 %v1200
    %v1603 = vunpack.c.h.b16 %v1200
    %v1604 = vunpack.c.l.b16 %v1201
    %v1605 = vunpack.c.h.b16 %v1201
    %v1606 = vunpack.c.l.b16 %v1202
    %v1607 = vunpack.c.h.b16 %v1202
    %v1608 = vunpack.c.l.b16 %v1203
    %v1609 = vunpack.c.h.b16 %v1203
    %v1610 = vunpack.c.l.b16 %v1204
    %v1611 = vunpack.c.h.b16 %v1204
    %v1612 = vunpack.c.l.b16 %v1205
    %v1613 = vunpack.c.h.b16 %v1205
    %v1614 = vunpack.c.l.b16 %v1206
    %v1615 = vunpack.c.h.b16 %v1206
    %v1616 = vunpack.c.l.b16 %v1207
    %v1617 = vunpack.c.h.b16 %v1207
    %v1618 = vunpack.c.l.b16 %v1208
    %v1619 = vunpack.c.h.b16 %v1208
    %v1620 = vunpack.c.l.b16 %v1209
    %v1621 = vunpack.c.h.b16 %v1209
    %v1622 = vunpack.c.l.b16 %v1210
    %v1623 = vunpack.c.h.b16 %v1210
    %v1624 = vunpack.c.l.b16 %v1211
    %v1625 = vunpack.c.h.b16 %v1211
    %v1626 = vunpack.c.l.b16 %v1212
    %v1627 = vunpack.c.h.b16 %v1212
    %v1628 = vunpack.c.l.b16 %v1213
    %v1629 = vunpack.c.h.b16 %v1213
    %v1630 = vunpack.c.l.b16 %v1214
    %v1631 = vunpack.c.h.b16 %v1214
    %v1632 = vunpack.c.l.b16 %v1215
    %v1633 = vunpack.c.h.b16 %v1215
    %v1634 = vunpack.c.l.b16 %v1216
    %v1635 = vunpack.c.h.b16 %v1216
    %v1636 = vunpack.c.l.b16 %v1217
    %v1637 = vunpack.c.h.b16 %v1217
    %v1638 = vunpack.c.l.b16 %v1218
    %v1639 = vunpack.c.h.b16 %v1218
    %v1640 = vunpack.c.l.b16 %v1219
    %v1641 = vunpack.c.h.b16 %v1219
    %v1642 = vunpack.c.l.b16 %v1220
    %v1643 = vunpack.c.h.b16 %v1220
    %v1644 = vunpack.c.l.b16 %v1221
    %v1645 = vunpack.c.h.b16 %v1221
    %v1646 = vunpack.c.l.b16 %v1222
    %v1647 = vunpack.c.h.b16 %v1222
    %v1648 = vunpack.c.l.b16 %v1223
    %v1649 = vunpack.c.h.b16 %v1223
    %v1650 = vpack.c.b16 %v1398, %v1394
    %v1651 = vpack.c.b16 %v1399, %v1395
    %v1652 = vpack.c.b16 %v1400, %v1396
    %v1653 = vpack.c.b16 %v1401, %v1397
    %v1654 = vpack.c.b16 %v1406, %v1402
    %v1655 = vpack.c.b16 %v1407, %v1403
    %v1656 = vpack.c.b16 %v1408, %v1404
    %v1657 = vpack.c.b16 %v1409, %v1405
    %v1658 = vpack.c.b16 %v1414, %v1410
    %v1659 = vpack.c.b16 %v1415, %v1411
    %v1660 = vpack.c.b16 %v1416, %v1412
    %v1661 = vpack.c.b16 %v1417, %v1413
    %v1662 = vpack.c.b16 %v1422, %v1418
    %v1663 = vpack.c.b16 %v1423, %v1419
    %v1664 = vpack.c.b16 %v1424, %v1420
    %v1665 = vpack.c.b16 %v1425, %v1421
    %v1666 = vpack.c.b16 %v1430, %v1426
    %v1667 = vpack.c.b16 %v1431, %v1427
    %v1668 = vpack.c.b16 %v1432, %v1428
    %v1669 = vpack.c.b16 %v1433, %v1429
    %v1670 = vpack.c.b16 %v1438, %v1434
    %v1671 = vpack.c.b16 %v1439, %v1435
    %v1672 = vpack.c.b16 %v1440, %v1436
    %v1673 = vpack.c.b16 %v1441, %v1437
    %v1674 = vpack.c.b16 %v1446, %v1442
    %v1675 = vpack.c.b16 %v1447, %v1443
    %v1676 = vpack.c.b16 %v1448, %v1444
    %v1677 = vpack.c.b16 %v1449, %v1445
    %v1678 = vpack.c.b16 %v1454, %v1450
    %v1679 = vpack.c.b16 %v1455, %v1451
    %v1680 = vpack.c.b16 %v1456, %v1452
    %v1681 = vpack.c.b16 %v1457, %v1453
    %v1682 = vpack.c.b16 %v1462, %v1458
    %v1683 = vpack.c.b16 %v1463, %v1459
    %v1684 = vpack.c.b16 %v1464, %v1460
    %v1685 = vpack.c.b16 %v1465, %v1461
    %v1686 = vpack.c.b16 %v1470, %v1466
    %v1687 = vpack.c.b16 %v1471, %v1467
    %v1688 = vpack.c.b16 %v1472, %v1468
    %v1689 = vpack.c.b16 %v1473, %v1469
    %v1690 = vpack.c.b16 %v1478, %v1474
    %v1691 = vpack.c.b16 %v1479, %v1475
    %v1692 = vpack.c.b16 %v1480, %v1476
    %v1693 = vpack.c.b16 %v1481, %v1477
    %v1694 = vpack.c.b16 %v1486, %v1482
    %v1695 = vpack.c.b16 %v1487, %v1483
    %v1696 = vpack.c.b16 %v1488, %v1484
    %v1697 = vpack.c.b16 %v1489, %v1485
    %v1698 = vpack.c.b16 %v1494, %v1490
    %v1699 = vpack.c.b16 %v1495, %v1491
    %v1700 = vpack.c.b16 %v1496, %v1492
    %v1701 = vpack.c.b16 %v1497, %v1493
    %v1702 = vpack.c.b16 %v1502, %v1498
    %v1703 = vpack.c.b16 %v1503, %v1499
    %v1704 = vpack.c.b16 %v1504, %v1500
    %v1705 = vpack.c.b16 %v1505, %v1501
    %v1706 = vpack.c.b16 %v1510, %v1506
    %v1707 = vpack.c.b16 %v1511, %v1507
    %v1708 = vpack.c.b16 %v1512, %v1508
    %v1709 = vpack.c.b16 %v1513, %v1509
    %v1710 = vpack.c.b16 %v1518, %v1514
    %v1711 = vpack.c.b16 %v1519, %v1515
    %v1712 = vpack.c.b16 %v1520, %v1516
    %v1713 = vpack.c.b16 %v1521, %v1517
    %v1714 = vpack.c.b16 %v1526, %v1522
    %v1715 = vpack.c.b16 %v1527, %v1523
    %v1716 = vpack.c.b16 %v1528, %v1524
    %v1717 = vpack.c.b16 %v1529, %v1525
    %v1718 = vpack.c.b16 %v1534, %v1530
    %v1719 = vpack.c.b16 %v1535, %v1531
    %v1720 = vpack.c.b16 %v1536, %v1532
    %v1721 = vpack.c.b16 %v1537, %v1533
    %v1722 = vpack.c.b16 %v1542, %v1538
    %v1723 = vpack.c.b16 %v1543, %v1539
    %v1724 = vpack.c.b16 %v1544, %v1540
    %v1725 = vpack.c.b16 %v1545, %v1541
    %v1726 = vpack.c.b16 %v1550, %v1546
    %v1727 = vpack.c.b16 %v1551, %v1547
    %v1728 = vpack.c.b16 %v1552, %v1548
    %v1729 = vpack.c.b16 %v1553, %v1549
    %v1730 = vpack.c.b16 %v1558, %v1554
    %v1731 = vpack.c.b16 %v1559, %v1555
    %v1732 = vpack.c.b16 %v1560, %v1556
    %v1733 = vpack.c.b16 %v1561, %v1557
    %v1734 = vpack.c.b16 %v1566, %v1562
    %v1735 = vpack.c.b16 %v1567, %v1563
    %v1736 = vpack.c.b16 %v1568, %v1564
    %v1737 = vpack.c.b16 %v1569, %v1565
    %v1738 = vpack.c.b16 %v1574, %v1570
    %v1739 = vpack.c.b16 %v1575, %v1571
    %v1740 = vpack.c.b16 %v1576, %v1572
    %v1741 = vpack.c.b16 %v1577, %v1573
    %v1742 = vpack.c.b16 %v1582, %v1578
    %v1743 = vpack.c.b16 %v1583, %v1579
    %v1744 = vpack.c.b16 %v1584, %v1580
    %v1745 = vpack.c.b16 %v1585, %v1581
    %v1746 = vpack.c.b16 %v1590, %v1586
    %v1747 = vpack.c.b16 %v1591, %v1587
    %v1748 = vpack.c.b16 %v1592, %v1588
    %v1749 = vpack.c.b16 %v1593, %v1589
    %v1750 = vpack.c.b16 %v1598, %v1594
    %v1751 = vpack.c.b16 %v1599, %v1595
    %v1752 = vpack.c.b16 %v1600, %v1596
    %v1753 = vpack.c.b16 %v1601, %v1597
    %v1754 = vpack.c.b16 %v1606, %v1602
    %v1755 = vpack.c.b16 %v1607, %v1603
    %v1756 = vpack.c.b16 %v1608, %v1604
    %v1757 = vpack.c.b16 %v1609, %v1605
    %v1758 = vpack.c.b16 %v1614, %v1610
    %v1759 = vpack.c.b16 %v1615, %v1611
    %v1760 = vpack.c.b16 %v1616, %v1612
    %v1761 = vpack.c.b16 %v1617, %v1613
    %v1762 = vpack.c.b16 %v1622, %v1618
    %v1763 = vpack.c.b16 %v1623, %v1619
    %v1764 = vpack.c.b16 %v1624, %v1620
    %v1765 = vpack.c.b16 %v1625, %v1621
    %v1766 = vpack.c.b16 %v1630, %v1626
    %v1767 = vpack.c.b16 %v1631, %v1627
    %v1768 = vpack.c.b16 %v1632, %v1628
    %v1769 = vpack.c.b16 %v1633, %v1629
    %v1770 = vpack.c.b16 %v1638, %v1634
    %v1771 = vpack.c.b16 %v1639, %v1635
    %v1772 = vpack.c.b16 %v1640, %v1636
    %v1773 = vpack.c.b16 %v1641, %v1637
    %v1774 = vpack.c.b16 %v1646, %v1642
    %v1775 = vpack.c.b16 %v1647, %v1643
    %v1776 = vpack.c.b16 %v1648, %v1644
    %v1777 = vpack.c.b16 %v1649, %v1645
    %1906 = vmatprep.subr.bf16.mxu0 %v1651
    %1907 = vmatpush1.bf16.msra.mxu0 %v1650
    %1908 = vmatprep.subr.bf16.mxu0 %v1655
    %1909 = vmatpush1.bf16.msra.mxu0 %v1654
    %1910 = vmatprep.subr.bf16.mxu0 %v1659
    %1911 = vmatpush1.bf16.msra.mxu0 %v1658
    %1912 = vmatprep.subr.bf16.mxu0 %v1663
    %1913 = vmatpush1.bf16.msra.mxu0 %v1662
    %1914 = vmatprep.subr.bf16.mxu0 %v1667
    %1915 = vmatpush1.bf16.msra.mxu0 %v1666
    %1916 = vmatprep.subr.bf16.mxu0 %v1671
    %1917 = vmatpush1.bf16.msra.mxu0 %v1670
    %1918 = vmatprep.subr.bf16.mxu0 %v1675
    %1919 = vmatpush1.bf16.msra.mxu0 %v1674
    %1920 = vmatprep.subr.bf16.mxu0 %v1679
    %1921 = vmatpush1.bf16.msra.mxu0 %v1678
    %1922 = vmatprep.subr.bf16.mxu0 %v1683
    %1923 = vmatpush1.bf16.msra.mxu0 %v1682
    %1924 = vmatprep.subr.bf16.mxu0 %v1687
    %1925 = vmatpush1.bf16.msra.mxu0 %v1686
    %1926 = vmatprep.subr.bf16.mxu0 %v1691
    %1927 = vmatpush1.bf16.msra.mxu0 %v1690
    %1928 = vmatprep.subr.bf16.mxu0 %v1695
    %1929 = vmatpush1.bf16.msra.mxu0 %v1694
    %1930 = vmatprep.subr.bf16.mxu0 %v1699
    %1931 = vmatpush1.bf16.msra.mxu0 %v1698
    %1932 = vmatprep.subr.bf16.mxu0 %v1703
    %1933 = vmatpush1.bf16.msra.mxu0 %v1702
    %1934 = vmatprep.subr.bf16.mxu0 %v1707
    %1935 = vmatpush1.bf16.msra.mxu0 %v1706
    %1936 = vmatprep.subr.bf16.mxu0 %v1711
    %1937 = vmatpush1.bf16.msra.mxu0 %v1710
    %1938 = vmatprep.mubr.bf16.mxu0 %v1259
    %1939 = vmatmul.mubr.bf16.gmra.mrb[0].mxu0 %v1258
    %v1940 = vpop.f32.mrb[0].mxu0
    %v1941 = vadd.f32 %v1229, %v1940
    %v1942 = vpop.f32.mrb[0].mxu0
    %v1943 = vadd.f32 %v1233, %v1942
    %v1944 = vpop.f32.mrb[0].mxu0
    %v1945 = vadd.f32 %v1229, %v1944
    %v1946 = vpop.f32.mrb[0].mxu0
    %v1947 = vadd.f32 %v1233, %v1946
    %1948 = vdwg.mxu0
    %1949 = vmatprep.subr.bf16.mxu0 %v1715
    %1950 = vmatpush1.bf16.msra.mxu0 %v1714
    %1951 = vmatprep.subr.bf16.mxu0 %v1719
    %1952 = vmatpush1.bf16.msra.mxu0 %v1718
    %1953 = vmatprep.subr.bf16.mxu0 %v1723
    %1954 = vmatpush1.bf16.msra.mxu0 %v1722
    %1955 = vmatprep.subr.bf16.mxu0 %v1727
    %1956 = vmatpush1.bf16.msra.mxu0 %v1726
    %1957 = vmatprep.subr.bf16.mxu0 %v1731
    %1958 = vmatpush1.bf16.msra.mxu0 %v1730
    %1959 = vmatprep.subr.bf16.mxu0 %v1735
    %1960 = vmatpush1.bf16.msra.mxu0 %v1734
    %1961 = vmatprep.subr.bf16.mxu0 %v1739
    %1962 = vmatpush1.bf16.msra.mxu0 %v1738
    %1963 = vmatprep.subr.bf16.mxu0 %v1743
    %1964 = vmatpush1.bf16.msra.mxu0 %v1742
    %1965 = vmatprep.subr.bf16.mxu0 %v1747
    %1966 = vmatpush1.bf16.msra.mxu0 %v1746
    %1967 = vmatprep.subr.bf16.mxu0 %v1751
    %1968 = vmatpush1.bf16.msra.mxu0 %v1750
    %1969 = vmatprep.subr.bf16.mxu0 %v1755
    %1970 = vmatpush1.bf16.msra.mxu0 %v1754
    %1971 = vmatprep.subr.bf16.mxu0 %v1759
    %1972 = vmatpush1.bf16.msra.mxu0 %v1758
    %1973 = vmatprep.subr.bf16.mxu0 %v1763
    %1974 = vmatpush1.bf16.msra.mxu0 %v1762
    %1975 = vmatprep.subr.bf16.mxu0 %v1767
    %1976 = vmatpush1.bf16.msra.mxu0 %v1766
    %1977 = vmatprep.subr.bf16.mxu0 %v1771
    %1978 = vmatpush1.bf16.msra.mxu0 %v1770
    %1979 = vmatprep.subr.bf16.mxu0 %v1775
    %1980 = vmatpush1.bf16.msra.mxu0 %v1774
    %1981 = vmatprep.mubr.bf16.mxu0 %v1261
    %1982 = vmatmul.mubr.bf16.gmra.mrb[0].mxu0 %v1260
    %v1983 = vpop.f32.mrb[0].mxu0
    %v1984 = vadd.f32 %v1941, %v1983
    %v1985 = vpop.f32.mrb[0].mxu0
    %v1986 = vadd.f32 %v1943, %v1985
    %v1987 = vpop.f32.mrb[0].mxu0
    %v1988 = vadd.f32 %v1945, %v1987
    %v1989 = vpop.f32.mrb[0].mxu0
    %v1990 = vadd.f32 %v1947, %v1989
    %1991 = vdwg.mxu0
    %1992 = vmatprep.subr.bf16.mxu0 %v1653
    %1993 = vmatpush1.bf16.msra.mxu0 %v1652
    %1994 = vmatprep.subr.bf16.mxu0 %v1657
    %1995 = vmatpush1.bf16.msra.mxu0 %v1656
    %1996 = vmatprep.subr.bf16.mxu0 %v1661
    %1997 = vmatpush1.bf16.msra.mxu0 %v1660
    %1998 = vmatprep.subr.bf16.mxu0 %v1665
    %1999 = vmatpush1.bf16.msra.mxu0 %v1664
    %2000 = vmatprep.subr.bf16.mxu0 %v1669
    %2001 = vmatpush1.bf16.msra.mxu0 %v1668
    %2002 = vmatprep.subr.bf16.mxu0 %v1673
    %2003 = vmatpush1.bf16.msra.mxu0 %v1672
    %2004 = vmatprep.subr.bf16.mxu0 %v1677
    %2005 = vmatpush1.bf16.msra.mxu0 %v1676
    %2006 = vmatprep.subr.bf16.mxu0 %v1681
    %2007 = vmatpush1.bf16.msra.mxu0 %v1680
    %2008 = vmatprep.subr.bf16.mxu0 %v1685
    %2009 = vmatpush1.bf16.msra.mxu0 %v1684
    %2010 = vmatprep.subr.bf16.mxu0 %v1689
    %2011 = vmatpush1.bf16.msra.mxu0 %v1688
    %2012 = vmatprep.subr.bf16.mxu0 %v1693
    %2013 = vmatpush1.bf16.msra.mxu0 %v1692
    %2014 = vmatprep.subr.bf16.mxu0 %v1697
    %2015 = vmatpush1.bf16.msra.mxu0 %v1696
    %2016 = vmatprep.subr.bf16.mxu0 %v1701
    %2017 = vmatpush1.bf16.msra.mxu0 %v1700
    %2018 = vmatprep.subr.bf16.mxu0 %v1705
    %2019 = vmatpush1.bf16.msra.mxu0 %v1704
    %2020 = vmatprep.subr.bf16.mxu0 %v1709
    %2021 = vmatpush1.bf16.msra.mxu0 %v1708
    %2022 = vmatprep.subr.bf16.mxu0 %v1713
    %2023 = vmatpush1.bf16.msra.mxu0 %v1712
    %2024 = vmatprep.mubr.bf16.mxu0 %v1259
    %2025 = vmatmul.mubr.bf16.gmra.mrb[0].mxu0 %v1258
    %v2026 = vpop.f32.mrb[0].mxu0
    %v2027 = vadd.f32 %v1237, %v2026
    %v2028 = vpop.f32.mrb[0].mxu0
    %v2029 = vadd.f32 %v1241, %v2028
    %v2030 = vpop.f32.mrb[0].mxu0
    %v2031 = vadd.f32 %v1237, %v2030
    %v2032 = vpop.f32.mrb[0].mxu0
    %v2033 = vadd.f32 %v1241, %v2032
    %2034 = vdwg.mxu0
    %2035 = vmatprep.subr.bf16.mxu0 %v1717
    %2036 = vmatpush1.bf16.msra.mxu0 %v1716
    %2037 = vmatprep.subr.bf16.mxu0 %v1721
    %2038 = vmatpush1.bf16.msra.mxu0 %v1720
    %2039 = vmatprep.subr.bf16.mxu0 %v1725
    %2040 = vmatpush1.bf16.msra.mxu0 %v1724
    %2041 = vmatprep.subr.bf16.mxu0 %v1729
    %2042 = vmatpush1.bf16.msra.mxu0 %v1728
    %2043 = vmatprep.subr.bf16.mxu0 %v1733
    %2044 = vmatpush1.bf16.msra.mxu0 %v1732
    %2045 = vmatprep.subr.bf16.mxu0 %v1737
    %2046 = vmatpush1.bf16.msra.mxu0 %v1736
    %2047 = vmatprep.subr.bf16.mxu0 %v1741
    %2048 = vmatpush1.bf16.msra.mxu0 %v1740
    %2049 = vmatprep.subr.bf16.mxu0 %v1745
    %2050 = vmatpush1.bf16.msra.mxu0 %v1744
    %2051 = vmatprep.subr.bf16.mxu0 %v1749
    %2052 = vmatpush1.bf16.msra.mxu0 %v1748
    %2053 = vmatprep.subr.bf16.mxu0 %v1753
    %2054 = vmatpush1.bf16.msra.mxu0 %v1752
    %2055 = vmatprep.subr.bf16.mxu0 %v1757
    %2056 = vmatpush1.bf16.msra.mxu0 %v1756
    %2057 = vmatprep.subr.bf16.mxu0 %v1761
    %2058 = vmatpush1.bf16.msra.mxu0 %v1760
    %2059 = vmatprep.subr.bf16.mxu0 %v1765
    %2060 = vmatpush1.bf16.msra.mxu0 %v1764
    %2061 = vmatprep.subr.bf16.mxu0 %v1769
    %2062 = vmatpush1.bf16.msra.mxu0 %v1768
    %2063 = vmatprep.subr.bf16.mxu0 %v1773
    %2064 = vmatpush1.bf16.msra.mxu0 %v1772
    %2065 = vmatprep.subr.bf16.mxu0 %v1777
    %2066 = vmatpush1.bf16.msra.mxu0 %v1776
    %2067 = vmatprep.mubr.bf16.mxu0 %v1261
    %2068 = vmatmul.mubr.bf16.gmra.mrb[0].mxu0 %v1260
    %v2069 = vpop.f32.mrb[0].mxu0
    %v2070 = vadd.f32 %v2027, %v2069
    %v2071 = vpop.f32.mrb[0].mxu0
    %v2072 = vadd.f32 %v2029, %v2071
    %v2073 = vpop.f32.mrb[0].mxu0
    %v2074 = vadd.f32 %v2031, %v2073
    %v2075 = vpop.f32.mrb[0].mxu0
    %v2076 = vadd.f32 %v2033, %v2075
    %2077 = vdwg.mxu0
    %v2078 = vmax.f32 %v1984, 0.0
    %v2079 = vmax.f32 %v1986, 0.0
    %v2080 = vmax.f32 %v2070, 0.0
    %v2081 = vmax.f32 %v2072, 0.0
    %v2082 = vmax.f32 %v1988, 0.0
    %v2083 = vmax.f32 %v1990, 0.0
    %v2084 = vmax.f32 %v2074, 0.0
    %v2085 = vmax.f32 %v2076, 0.0
    %v2086 = vpack.c.bf16 %v2082, %v2078
    %v2087 = vpack.c.bf16 %v2083, %v2079
    %v2088 = vpack.c.bf16 %v2084, %v2080
    %v2089 = vpack.c.bf16 %v2085, %v2081
    %v2090 = vld [vmem:[#allocation6] sm:$0xff]
    %v2091 = vld [vmem:[#allocation6 + $0x8] sm:$0xff]
    %v2092 = vld [vmem:[#allocation6 + $0x10] sm:$0xff]
    %v2093 = vld [vmem:[#allocation6 + $0x18] sm:$0xff]
    %v2094 = vld [vmem:[#allocation6 + $0x20] sm:$0xff]
    %v2095 = vld [vmem:[#allocation6 + $0x28] sm:$0xff]
    %v2096 = vld [vmem:[#allocation6 + $0x30] sm:$0xff]
    %v2097 = vld [vmem:[#allocation6 + $0x38] sm:$0xff]
    %v2098 = vld [vmem:[#allocation6 + $0x40] sm:$0xff]
    %v2099 = vld [vmem:[#allocation6 + $0x48] sm:$0xff]
    %v2100 = vld [vmem:[#allocation6 + $0x50] sm:$0xff]
    %v2101 = vld [vmem:[#allocation6 + $0x58] sm:$0xff]
    %v2102 = vld [vmem:[#allocation6 + $0x60] sm:$0xff]
    %v2103 = vld [vmem:[#allocation6 + $0x68] sm:$0xff]
    %v2104 = vld [vmem:[#allocation6 + $0x70] sm:$0xff]
    %v2105 = vld [vmem:[#allocation6 + $0x78] sm:$0xff]
    %v2106 = vld [vmem:[#allocation6 + $0x80] sm:$0xff]
    %v2107 = vld [vmem:[#allocation6 + $0x88] sm:$0xff]
    %v2108 = vld [vmem:[#allocation6 + $0x90] sm:$0xff]
    %v2109 = vld [vmem:[#allocation6 + $0x98] sm:$0xff]
    %v2110 = vld [vmem:[#allocation6 + $0xa0] sm:$0xff]
    %v2111 = vld [vmem:[#allocation6 + $0xa8] sm:$0xff]
    %v2112 = vld [vmem:[#allocation6 + $0xb0] sm:$0xff]
    %v2113 = vld [vmem:[#allocation6 + $0xb8] sm:$0xff]
    %v2114 = vld [vmem:[#allocation6 + $0xc0] sm:$0xff]
    %v2115 = vld [vmem:[#allocation6 + $0xc8] sm:$0xff]
    %v2116 = vld [vmem:[#allocation6 + $0xd0] sm:$0xff]
    %v2117 = vld [vmem:[#allocation6 + $0xd8] sm:$0xff]
    %v2118 = vld [vmem:[#allocation6 + $0xe0] sm:$0xff]
    %v2119 = vld [vmem:[#allocation6 + $0xe8] sm:$0xff]
    %v2120 = vld [vmem:[#allocation6 + $0xf0] sm:$0xff]
    %v2121 = vld [vmem:[#allocation6 + $0xf8] sm:$0xff]
    %v2122 = vld [vmem:[#allocation6 + $0x100] sm:$0xff]
    %v2123 = vld [vmem:[#allocation6 + $0x108] sm:$0xff]
    %v2124 = vld [vmem:[#allocation6 + $0x110] sm:$0xff]
    %v2125 = vld [vmem:[#allocation6 + $0x118] sm:$0xff]
    %v2126 = vld [vmem:[#allocation6 + $0x120] sm:$0xff]
    %v2127 = vld [vmem:[#allocation6 + $0x128] sm:$0xff]
    %v2128 = vld [vmem:[#allocation6 + $0x130] sm:$0xff]
    %v2129 = vld [vmem:[#allocation6 + $0x138] sm:$0xff]
    %v2130 = vld [vmem:[#allocation6 + $0x140] sm:$0xff]
    %v2131 = vld [vmem:[#allocation6 + $0x148] sm:$0xff]
    %v2132 = vld [vmem:[#allocation6 + $0x150] sm:$0xff]
    %v2133 = vld [vmem:[#allocation6 + $0x158] sm:$0xff]
    %v2134 = vld [vmem:[#allocation6 + $0x160] sm:$0xff]
    %v2135 = vld [vmem:[#allocation6 + $0x168] sm:$0xff]
    %v2136 = vld [vmem:[#allocation6 + $0x170] sm:$0xff]
    %v2137 = vld [vmem:[#allocation6 + $0x178] sm:$0xff]
    %v2138 = vld [vmem:[#allocation6 + $0x180] sm:$0xff]
    %v2139 = vld [vmem:[#allocation6 + $0x188] sm:$0xff]
    %v2140 = vld [vmem:[#allocation6 + $0x190] sm:$0xff]
    %v2141 = vld [vmem:[#allocation6 + $0x198] sm:$0xff]
    %v2142 = vld [vmem:[#allocation6 + $0x1a0] sm:$0xff]
    %v2143 = vld [vmem:[#allocation6 + $0x1a8] sm:$0xff]
    %v2144 = vld [vmem:[#allocation6 + $0x1b0] sm:$0xff]
    %v2145 = vld [vmem:[#allocation6 + $0x1b8] sm:$0xff]
    %v2146 = vld [vmem:[#allocation6 + $0x1c0] sm:$0xff]
    %v2147 = vld [vmem:[#allocation6 + $0x1c8] sm:$0xff]
    %v2148 = vld [vmem:[#allocation6 + $0x1d0] sm:$0xff]
    %v2149 = vld [vmem:[#allocation6 + $0x1d8] sm:$0xff]
    %v2150 = vld [vmem:[#allocation6 + $0x1e0] sm:$0xff]
    %v2151 = vld [vmem:[#allocation6 + $0x1e8] sm:$0xff]
    %v2152 = vld [vmem:[#allocation6 + $0x1f0] sm:$0xff]
    %v2153 = vld [vmem:[#allocation6 + $0x1f8] sm:$0xff]
    %v2154 = vld [vmem:[#allocation7] sm:$0xff]
    %v2155 = vld [vmem:[#allocation7 + $0x8] sm:$0xff]
    %v2156 = vld [vmem:[#allocation7 + $0x10] sm:$0xff]
    %v2157 = vld [vmem:[#allocation7 + $0x18] sm:$0xff]
    %v2158 = vld [vmem:[#allocation7 + $0x20] sm:$0xff]
    %v2159 = vld [vmem:[#allocation7 + $0x28] sm:$0xff]
    %v2160 = vld [vmem:[#allocation7 + $0x30] sm:$0xff]
    %v2161 = vld [vmem:[#allocation7 + $0x38] sm:$0xff]
    %v2162 = vld [vmem:[#allocation7 + $0x40] sm:$0xff]
    %v2163 = vld [vmem:[#allocation7 + $0x48] sm:$0xff]
    %v2164 = vld [vmem:[#allocation7 + $0x50] sm:$0xff]
    %v2165 = vld [vmem:[#allocation7 + $0x58] sm:$0xff]
    %v2166 = vld [vmem:[#allocation7 + $0x60] sm:$0xff]
    %v2167 = vld [vmem:[#allocation7 + $0x68] sm:$0xff]
    %v2168 = vld [vmem:[#allocation7 + $0x70] sm:$0xff]
    %v2169 = vld [vmem:[#allocation7 + $0x78] sm:$0xff]
    %v2170 = vld [vmem:[#allocation7 + $0x80] sm:$0xff]
    %v2171 = vld [vmem:[#allocation7 + $0x88] sm:$0xff]
    %v2172 = vld [vmem:[#allocation7 + $0x90] sm:$0xff]
    %v2173 = vld [vmem:[#allocation7 + $0x98] sm:$0xff]
    %v2174 = vld [vmem:[#allocation7 + $0xa0] sm:$0xff]
    %v2175 = vld [vmem:[#allocation7 + $0xa8] sm:$0xff]
    %v2176 = vld [vmem:[#allocation7 + $0xb0] sm:$0xff]
    %v2177 = vld [vmem:[#allocation7 + $0xb8] sm:$0xff]
    %v2178 = vld [vmem:[#allocation7 + $0xc0] sm:$0xff]
    %v2179 = vld [vmem:[#allocation7 + $0xc8] sm:$0xff]
    %v2180 = vld [vmem:[#allocation7 + $0xd0] sm:$0xff]
    %v2181 = vld [vmem:[#allocation7 + $0xd8] sm:$0xff]
    %v2182 = vld [vmem:[#allocation7 + $0xe0] sm:$0xff]
    %v2183 = vld [vmem:[#allocation7 + $0xe8] sm:$0xff]
    %v2184 = vld [vmem:[#allocation7 + $0xf0] sm:$0xff]
    %v2185 = vld [vmem:[#allocation7 + $0xf8] sm:$0xff]
    %v2186 = vld [vmem:[#allocation7 + $0x100] sm:$0xff]
    %v2187 = vld [vmem:[#allocation7 + $0x108] sm:$0xff]
    %v2188 = vld [vmem:[#allocation7 + $0x110] sm:$0xff]
    %v2189 = vld [vmem:[#allocation7 + $0x118] sm:$0xff]
    %v2190 = vld [vmem:[#allocation7 + $0x120] sm:$0xff]
    %v2191 = vld [vmem:[#allocation7 + $0x128] sm:$0xff]
    %v2192 = vld [vmem:[#allocation7 + $0x130] sm:$0xff]
    %v2193 = vld [vmem:[#allocation7 + $0x138] sm:$0xff]
    %v2194 = vld [vmem:[#allocation7 + $0x140] sm:$0xff]
    %v2195 = vld [vmem:[#allocation7 + $0x148] sm:$0xff]
    %v2196 = vld [vmem:[#allocation7 + $0x150] sm:$0xff]
    %v2197 = vld [vmem:[#allocation7 + $0x158] sm:$0xff]
    %v2198 = vld [vmem:[#allocation7 + $0x160] sm:$0xff]
    %v2199 = vld [vmem:[#allocation7 + $0x168] sm:$0xff]
    %v2200 = vld [vmem:[#allocation7 + $0x170] sm:$0xff]
    %v2201 = vld [vmem:[#allocation7 + $0x178] sm:$0xff]
    %v2202 = vld [vmem:[#allocation7 + $0x180] sm:$0xff]
    %v2203 = vld [vmem:[#allocation7 + $0x188] sm:$0xff]
    %v2204 = vld [vmem:[#allocation7 + $0x190] sm:$0xff]
    %v2205 = vld [vmem:[#allocation7 + $0x198] sm:$0xff]
    %v2206 = vld [vmem:[#allocation7 + $0x1a0] sm:$0xff]
    %v2207 = vld [vmem:[#allocation7 + $0x1a8] sm:$0xff]
    %v2208 = vld [vmem:[#allocation7 + $0x1b0] sm:$0xff]
    %v2209 = vld [vmem:[#allocation7 + $0x1b8] sm:$0xff]
    %v2210 = vld [vmem:[#allocation7 + $0x1c0] sm:$0xff]
    %v2211 = vld [vmem:[#allocation7 + $0x1c8] sm:$0xff]
    %v2212 = vld [vmem:[#allocation7 + $0x1d0] sm:$0xff]
    %v2213 = vld [vmem:[#allocation7 + $0x1d8] sm:$0xff]
    %v2214 = vld [vmem:[#allocation7 + $0x1e0] sm:$0xff]
    %v2215 = vld [vmem:[#allocation7 + $0x1e8] sm:$0xff]
    %v2216 = vld [vmem:[#allocation7 + $0x1f0] sm:$0xff]
    %v2217 = vld [vmem:[#allocation7 + $0x1f8] sm:$0xff]
    %v2282 = vunpack.c.l.b16 %v2154
    %v2283 = vunpack.c.h.b16 %v2154
    %v2284 = vunpack.c.l.b16 %v2155
    %v2285 = vunpack.c.h.b16 %v2155
    %v2286 = vunpack.c.l.b16 %v2156
    %v2287 = vunpack.c.h.b16 %v2156
    %v2288 = vunpack.c.l.b16 %v2157
    %v2289 = vunpack.c.h.b16 %v2157
    %v2290 = vunpack.c.l.b16 %v2158
    %v2291 = vunpack.c.h.b16 %v2158
    %v2292 = vunpack.c.l.b16 %v2159
    %v2293 = vunpack.c.h.b16 %v2159
    %v2294 = vunpack.c.l.b16 %v2160
    %v2295 = vunpack.c.h.b16 %v2160
    %v2296 = vunpack.c.l.b16 %v2161
    %v2297 = vunpack.c.h.b16 %v2161
    %v2298 = vunpack.c.l.b16 %v2162
    %v2299 = vunpack.c.h.b16 %v2162
    %v2300 = vunpack.c.l.b16 %v2163
    %v2301 = vunpack.c.h.b16 %v2163
    %v2302 = vunpack.c.l.b16 %v2164
    %v2303 = vunpack.c.h.b16 %v2164
    %v2304 = vunpack.c.l.b16 %v2165
    %v2305 = vunpack.c.h.b16 %v2165
    %v2306 = vunpack.c.l.b16 %v2166
    %v2307 = vunpack.c.h.b16 %v2166
    %v2308 = vunpack.c.l.b16 %v2167
    %v2309 = vunpack.c.h.b16 %v2167
    %v2310 = vunpack.c.l.b16 %v2168
    %v2311 = vunpack.c.h.b16 %v2168
    %v2312 = vunpack.c.l.b16 %v2169
    %v2313 = vunpack.c.h.b16 %v2169
    %v2314 = vunpack.c.l.b16 %v2170
    %v2315 = vunpack.c.h.b16 %v2170
    %v2316 = vunpack.c.l.b16 %v2171
    %v2317 = vunpack.c.h.b16 %v2171
    %v2318 = vunpack.c.l.b16 %v2172
    %v2319 = vunpack.c.h.b16 %v2172
    %v2320 = vunpack.c.l.b16 %v2173
    %v2321 = vunpack.c.h.b16 %v2173
    %v2322 = vunpack.c.l.b16 %v2174
    %v2323 = vunpack.c.h.b16 %v2174
    %v2324 = vunpack.c.l.b16 %v2175
    %v2325 = vunpack.c.h.b16 %v2175
    %v2326 = vunpack.c.l.b16 %v2176
    %v2327 = vunpack.c.h.b16 %v2176
    %v2328 = vunpack.c.l.b16 %v2177
    %v2329 = vunpack.c.h.b16 %v2177
    %v2330 = vunpack.c.l.b16 %v2178
    %v2331 = vunpack.c.h.b16 %v2178
    %v2332 = vunpack.c.l.b16 %v2179
    %v2333 = vunpack.c.h.b16 %v2179
    %v2334 = vunpack.c.l.b16 %v2180
    %v2335 = vunpack.c.h.b16 %v2180
    %v2336 = vunpack.c.l.b16 %v2181
    %v2337 = vunpack.c.h.b16 %v2181
    %v2338 = vunpack.c.l.b16 %v2182
    %v2339 = vunpack.c.h.b16 %v2182
    %v2340 = vunpack.c.l.b16 %v2183
    %v2341 = vunpack.c.h.b16 %v2183
    %v2342 = vunpack.c.l.b16 %v2184
    %v2343 = vunpack.c.h.b16 %v2184
    %v2344 = vunpack.c.l.b16 %v2185
    %v2345 = vunpack.c.h.b16 %v2185
    %v2346 = vunpack.c.l.b16 %v2186
    %v2347 = vunpack.c.h.b16 %v2186
    %v2348 = vunpack.c.l.b16 %v2187
    %v2349 = vunpack.c.h.b16 %v2187
    %v2350 = vunpack.c.l.b16 %v2188
    %v2351 = vunpack.c.h.b16 %v2188
    %v2352 = vunpack.c.l.b16 %v2189
    %v2353 = vunpack.c.h.b16 %v2189
    %v2354 = vunpack.c.l.b16 %v2190
    %v2355 = vunpack.c.h.b16 %v2190
    %v2356 = vunpack.c.l.b16 %v2191
    %v2357 = vunpack.c.h.b16 %v2191
    %v2358 = vunpack.c.l.b16 %v2192
    %v2359 = vunpack.c.h.b16 %v2192
    %v2360 = vunpack.c.l.b16 %v2193
    %v2361 = vunpack.c.h.b16 %v2193
    %v2362 = vunpack.c.l.b16 %v2194
    %v2363 = vunpack.c.h.b16 %v2194
    %v2364 = vunpack.c.l.b16 %v2195
    %v2365 = vunpack.c.h.b16 %v2195
    %v2366 = vunpack.c.l.b16 %v2196
    %v2367 = vunpack.c.h.b16 %v2196
    %v2368 = vunpack.c.l.b16 %v2197
    %v2369 = vunpack.c.h.b16 %v2197
    %v2370 = vunpack.c.l.b16 %v2198
    %v2371 = vunpack.c.h.b16 %v2198
    %v2372 = vunpack.c.l.b16 %v2199
    %v2373 = vunpack.c.h.b16 %v2199
    %v2374 = vunpack.c.l.b16 %v2200
    %v2375 = vunpack.c.h.b16 %v2200
    %v2376 = vunpack.c.l.b16 %v2201
    %v2377 = vunpack.c.h.b16 %v2201
    %v2378 = vunpack.c.l.b16 %v2202
    %v2379 = vunpack.c.h.b16 %v2202
    %v2380 = vunpack.c.l.b16 %v2203
    %v2381 = vunpack.c.h.b16 %v2203
    %v2382 = vunpack.c.l.b16 %v2204
    %v2383 = vunpack.c.h.b16 %v2204
    %v2384 = vunpack.c.l.b16 %v2205
    %v2385 = vunpack.c.h.b16 %v2205
    %v2386 = vunpack.c.l.b16 %v2206
    %v2387 = vunpack.c.h.b16 %v2206
    %v2388 = vunpack.c.l.b16 %v2207
    %v2389 = vunpack.c.h.b16 %v2207
    %v2390 = vunpack.c.l.b16 %v2208
    %v2391 = vunpack.c.h.b16 %v2208
    %v2392 = vunpack.c.l.b16 %v2209
    %v2393 = vunpack.c.h.b16 %v2209
    %v2394 = vunpack.c.l.b16 %v2210
    %v2395 = vunpack.c.h.b16 %v2210
    %v2396 = vunpack.c.l.b16 %v2211
    %v2397 = vunpack.c.h.b16 %v2211
    %v2398 = vunpack.c.l.b16 %v2212
    %v2399 = vunpack.c.h.b16 %v2212
    %v2400 = vunpack.c.l.b16 %v2213
    %v2401 = vunpack.c.h.b16 %v2213
    %v2402 = vunpack.c.l.b16 %v2214
    %v2403 = vunpack.c.h.b16 %v2214
    %v2404 = vunpack.c.l.b16 %v2215
    %v2405 = vunpack.c.h.b16 %v2215
    %v2406 = vunpack.c.l.b16 %v2216
    %v2407 = vunpack.c.h.b16 %v2216
    %v2408 = vunpack.c.l.b16 %v2217
    %v2409 = vunpack.c.h.b16 %v2217
    %v2410 = vpack.c.b16 %v2284, %v2282
    %v2411 = vpack.c.b16 %v2285, %v2283
    %v2412 = vpack.c.b16 %v2288, %v2286
    %v2413 = vpack.c.b16 %v2289, %v2287
    %v2414 = vpack.c.b16 %v2292, %v2290
    %v2415 = vpack.c.b16 %v2293, %v2291
    %v2416 = vpack.c.b16 %v2296, %v2294
    %v2417 = vpack.c.b16 %v2297, %v2295
    %v2418 = vpack.c.b16 %v2300, %v2298
    %v2419 = vpack.c.b16 %v2301, %v2299
    %v2420 = vpack.c.b16 %v2304, %v2302
    %v2421 = vpack.c.b16 %v2305, %v2303
    %v2422 = vpack.c.b16 %v2308, %v2306
    %v2423 = vpack.c.b16 %v2309, %v2307
    %v2424 = vpack.c.b16 %v2312, %v2310
    %v2425 = vpack.c.b16 %v2313, %v2311
    %v2426 = vpack.c.b16 %v2316, %v2314
    %v2427 = vpack.c.b16 %v2317, %v2315
    %v2428 = vpack.c.b16 %v2320, %v2318
    %v2429 = vpack.c.b16 %v2321, %v2319
    %v2430 = vpack.c.b16 %v2324, %v2322
    %v2431 = vpack.c.b16 %v2325, %v2323
    %v2432 = vpack.c.b16 %v2328, %v2326
    %v2433 = vpack.c.b16 %v2329, %v2327
    %v2434 = vpack.c.b16 %v2332, %v2330
    %v2435 = vpack.c.b16 %v2333, %v2331
    %v2436 = vpack.c.b16 %v2336, %v2334
    %v2437 = vpack.c.b16 %v2337, %v2335
    %v2438 = vpack.c.b16 %v2340, %v2338
    %v2439 = vpack.c.b16 %v2341, %v2339
    %v2440 = vpack.c.b16 %v2344, %v2342
    %v2441 = vpack.c.b16 %v2345, %v2343
    %v2442 = vpack.c.b16 %v2348, %v2346
    %v2443 = vpack.c.b16 %v2349, %v2347
    %v2444 = vpack.c.b16 %v2352, %v2350
    %v2445 = vpack.c.b16 %v2353, %v2351
    %v2446 = vpack.c.b16 %v2356, %v2354
    %v2447 = vpack.c.b16 %v2357, %v2355
    %v2448 = vpack.c.b16 %v2360, %v2358
    %v2449 = vpack.c.b16 %v2361, %v2359
    %v2450 = vpack.c.b16 %v2364, %v2362
    %v2451 = vpack.c.b16 %v2365, %v2363
    %v2452 = vpack.c.b16 %v2368, %v2366
    %v2453 = vpack.c.b16 %v2369, %v2367
    %v2454 = vpack.c.b16 %v2372, %v2370
    %v2455 = vpack.c.b16 %v2373, %v2371
    %v2456 = vpack.c.b16 %v2376, %v2374
    %v2457 = vpack.c.b16 %v2377, %v2375
    %v2458 = vpack.c.b16 %v2380, %v2378
    %v2459 = vpack.c.b16 %v2381, %v2379
    %v2460 = vpack.c.b16 %v2384, %v2382
    %v2461 = vpack.c.b16 %v2385, %v2383
    %v2462 = vpack.c.b16 %v2388, %v2386
    %v2463 = vpack.c.b16 %v2389, %v2387
    %v2464 = vpack.c.b16 %v2392, %v2390
    %v2465 = vpack.c.b16 %v2393, %v2391
    %v2466 = vpack.c.b16 %v2396, %v2394
    %v2467 = vpack.c.b16 %v2397, %v2395
    %v2468 = vpack.c.b16 %v2400, %v2398
    %v2469 = vpack.c.b16 %v2401, %v2399
    %v2470 = vpack.c.b16 %v2404, %v2402
    %v2471 = vpack.c.b16 %v2405, %v2403
    %v2472 = vpack.c.b16 %v2408, %v2406
    %v2473 = vpack.c.b16 %v2409, %v2407
    %2538 = vmatprep.subr.bf16.mxu0 %v2411
    %2539 = vmatpush1.bf16.msra.mxu0 %v2410
    %2540 = vmatprep.subr.bf16.mxu0 %v2413
    %2541 = vmatpush1.bf16.msra.mxu0 %v2412
    %2542 = vmatprep.subr.bf16.mxu0 %v2415
    %2543 = vmatpush1.bf16.msra.mxu0 %v2414
    %2544 = vmatprep.subr.bf16.mxu0 %v2417
    %2545 = vmatpush1.bf16.msra.mxu0 %v2416
    %2546 = vmatprep.subr.bf16.mxu0 %v2419
    %2547 = vmatpush1.bf16.msra.mxu0 %v2418
    %2548 = vmatprep.subr.bf16.mxu0 %v2421
    %2549 = vmatpush1.bf16.msra.mxu0 %v2420
    %2550 = vmatprep.subr.bf16.mxu0 %v2423
    %2551 = vmatpush1.bf16.msra.mxu0 %v2422
    %2552 = vmatprep.subr.bf16.mxu0 %v2425
    %2553 = vmatpush1.bf16.msra.mxu0 %v2424
    %2554 = vmatprep.subr.bf16.mxu0 %v2427
    %2555 = vmatpush1.bf16.msra.mxu0 %v2426
    %2556 = vmatprep.subr.bf16.mxu0 %v2429
    %2557 = vmatpush1.bf16.msra.mxu0 %v2428
    %2558 = vmatprep.subr.bf16.mxu0 %v2431
    %2559 = vmatpush1.bf16.msra.mxu0 %v2430
    %2560 = vmatprep.subr.bf16.mxu0 %v2433
    %2561 = vmatpush1.bf16.msra.mxu0 %v2432
    %2562 = vmatprep.subr.bf16.mxu0 %v2435
    %2563 = vmatpush1.bf16.msra.mxu0 %v2434
    %2564 = vmatprep.subr.bf16.mxu0 %v2437
    %2565 = vmatpush1.bf16.msra.mxu0 %v2436
    %2566 = vmatprep.subr.bf16.mxu0 %v2439
    %2567 = vmatpush1.bf16.msra.mxu0 %v2438
    %2568 = vmatprep.subr.bf16.mxu0 %v2441
    %2569 = vmatpush1.bf16.msra.mxu0 %v2440
    %2570 = vmatprep.mubr.bf16.mxu0 %v2087
    %2571 = vmatmul.mubr.bf16.gmra.mrb[0].mxu0 %v2086
    %v2572 = vpop.f32.mrb[0].mxu0
    %v2573 = vadd.f32 0.0, %v2572
    %v2574 = vpop.f32.mrb[0].mxu0
    %v2575 = vadd.f32 0.0, %v2574
    %v2576 = vpop.f32.mrb[0].mxu0
    %v2577 = vadd.f32 0.0, %v2576
    %v2578 = vpop.f32.mrb[0].mxu0
    %v2579 = vadd.f32 0.0, %v2578
    %2580 = vdwg.mxu0
    %2581 = vmatprep.subr.bf16.mxu0 %v2443
    %2582 = vmatpush1.bf16.msra.mxu0 %v2442
    %2583 = vmatprep.subr.bf16.mxu0 %v2445
    %2584 = vmatpush1.bf16.msra.mxu0 %v2444
    %2585 = vmatprep.subr.bf16.mxu0 %v2447
    %2586 = vmatpush1.bf16.msra.mxu0 %v2446
    %2587 = vmatprep.subr.bf16.mxu0 %v2449
    %2588 = vmatpush1.bf16.msra.mxu0 %v2448
    %2589 = vmatprep.subr.bf16.mxu0 %v2451
    %2590 = vmatpush1.bf16.msra.mxu0 %v2450
    %2591 = vmatprep.subr.bf16.mxu0 %v2453
    %2592 = vmatpush1.bf16.msra.mxu0 %v2452
    %2593 = vmatprep.subr.bf16.mxu0 %v2455
    %2594 = vmatpush1.bf16.msra.mxu0 %v2454
    %2595 = vmatprep.subr.bf16.mxu0 %v2457
    %2596 = vmatpush1.bf16.msra.mxu0 %v2456
    %2597 = vmatprep.subr.bf16.mxu0 %v2459
    %2598 = vmatpush1.bf16.msra.mxu0 %v2458
    %2599 = vmatprep.subr.bf16.mxu0 %v2461
    %2600 = vmatpush1.bf16.msra.mxu0 %v2460
    %2601 = vmatprep.subr.bf16.mxu0 %v2463
    %2602 = vmatpush1.bf16.msra.mxu0 %v2462
    %2603 = vmatprep.subr.bf16.mxu0 %v2465
    %2604 = vmatpush1.bf16.msra.mxu0 %v2464
    %2605 = vmatprep.subr.bf16.mxu0 %v2467
    %2606 = vmatpush1.bf16.msra.mxu0 %v2466
    %2607 = vmatprep.subr.bf16.mxu0 %v2469
    %2608 = vmatpush1.bf16.msra.mxu0 %v2468
    %2609 = vmatprep.subr.bf16.mxu0 %v2471
    %2610 = vmatpush1.bf16.msra.mxu0 %v2470
    %2611 = vmatprep.subr.bf16.mxu0 %v2473
    %2612 = vmatpush1.bf16.msra.mxu0 %v2472
    %2613 = vmatprep.mubr.bf16.mxu0 %v2089
    %2614 = vmatmul.mubr.bf16.gmra.mrb[0].mxu0 %v2088
    %v2615 = vpop.f32.mrb[0].mxu0
    %v2616 = vadd.f32 %v2573, %v2615
    %v2617 = vpop.f32.mrb[0].mxu0
    %v2618 = vadd.f32 %v2575, %v2617
    %v2619 = vpop.f32.mrb[0].mxu0
    %v2620 = vadd.f32 %v2577, %v2619
    %v2621 = vpop.f32.mrb[0].mxu0
    %v2622 = vadd.f32 %v2579, %v2621
    %2623 = vdwg.mxu0
    %v2688 = vunpack.c.l.b16 %v2090
    %v2689 = vunpack.c.h.b16 %v2090
    %v2690 = vunpack.c.l.b16 %v2091
    %v2691 = vunpack.c.h.b16 %v2091
    %v2692 = vunpack.c.l.b16 %v2092
    %v2693 = vunpack.c.h.b16 %v2092
    %v2694 = vunpack.c.l.b16 %v2093
    %v2695 = vunpack.c.h.b16 %v2093
    %v2696 = vunpack.c.l.b16 %v2094
    %v2697 = vunpack.c.h.b16 %v2094
    %v2698 = vunpack.c.l.b16 %v2095
    %v2699 = vunpack.c.h.b16 %v2095
    %v2700 = vunpack.c.l.b16 %v2096
    %v2701 = vunpack.c.h.b16 %v2096
    %v2702 = vunpack.c.l.b16 %v2097
    %v2703 = vunpack.c.h.b16 %v2097
    %v2704 = vunpack.c.l.b16 %v2098
    %v2705 = vunpack.c.h.b16 %v2098
    %v2706 = vunpack.c.l.b16 %v2099
    %v2707 = vunpack.c.h.b16 %v2099
    %v2708 = vunpack.c.l.b16 %v2100
    %v2709 = vunpack.c.h.b16 %v2100
    %v2710 = vunpack.c.l.b16 %v2101
    %v2711 = vunpack.c.h.b16 %v2101
    %v2712 = vunpack.c.l.b16 %v2102
    %v2713 = vunpack.c.h.b16 %v2102
    %v2714 = vunpack.c.l.b16 %v2103
    %v2715 = vunpack.c.h.b16 %v2103
    %v2716 = vunpack.c.l.b16 %v2104
    %v2717 = vunpack.c.h.b16 %v2104
    %v2718 = vunpack.c.l.b16 %v2105
    %v2719 = vunpack.c.h.b16 %v2105
    %v2720 = vunpack.c.l.b16 %v2106
    %v2721 = vunpack.c.h.b16 %v2106
    %v2722 = vunpack.c.l.b16 %v2107
    %v2723 = vunpack.c.h.b16 %v2107
    %v2724 = vunpack.c.l.b16 %v2108
    %v2725 = vunpack.c.h.b16 %v2108
    %v2726 = vunpack.c.l.b16 %v2109
    %v2727 = vunpack.c.h.b16 %v2109
    %v2728 = vunpack.c.l.b16 %v2110
    %v2729 = vunpack.c.h.b16 %v2110
    %v2730 = vunpack.c.l.b16 %v2111
    %v2731 = vunpack.c.h.b16 %v2111
    %v2732 = vunpack.c.l.b16 %v2112
    %v2733 = vunpack.c.h.b16 %v2112
    %v2734 = vunpack.c.l.b16 %v2113
    %v2735 = vunpack.c.h.b16 %v2113
    %v2736 = vunpack.c.l.b16 %v2114
    %v2737 = vunpack.c.h.b16 %v2114
    %v2738 = vunpack.c.l.b16 %v2115
    %v2739 = vunpack.c.h.b16 %v2115
    %v2740 = vunpack.c.l.b16 %v2116
    %v2741 = vunpack.c.h.b16 %v2116
    %v2742 = vunpack.c.l.b16 %v2117
    %v2743 = vunpack.c.h.b16 %v2117
    %v2744 = vunpack.c.l.b16 %v2118
    %v2745 = vunpack.c.h.b16 %v2118
    %v2746 = vunpack.c.l.b16 %v2119
    %v2747 = vunpack.c.h.b16 %v2119
    %v2748 = vunpack.c.l.b16 %v2120
    %v2749 = vunpack.c.h.b16 %v2120
    %v2750 = vunpack.c.l.b16 %v2121
    %v2751 = vunpack.c.h.b16 %v2121
    %v2752 = vunpack.c.l.b16 %v2122
    %v2753 = vunpack.c.h.b16 %v2122
    %v2754 = vunpack.c.l.b16 %v2123
    %v2755 = vunpack.c.h.b16 %v2123
    %v2756 = vunpack.c.l.b16 %v2124
    %v2757 = vunpack.c.h.b16 %v2124
    %v2758 = vunpack.c.l.b16 %v2125
    %v2759 = vunpack.c.h.b16 %v2125
    %v2760 = vunpack.c.l.b16 %v2126
    %v2761 = vunpack.c.h.b16 %v2126
    %v2762 = vunpack.c.l.b16 %v2127
    %v2763 = vunpack.c.h.b16 %v2127
    %v2764 = vunpack.c.l.b16 %v2128
    %v2765 = vunpack.c.h.b16 %v2128
    %v2766 = vunpack.c.l.b16 %v2129
    %v2767 = vunpack.c.h.b16 %v2129
    %v2768 = vunpack.c.l.b16 %v2130
    %v2769 = vunpack.c.h.b16 %v2130
    %v2770 = vunpack.c.l.b16 %v2131
    %v2771 = vunpack.c.h.b16 %v2131
    %v2772 = vunpack.c.l.b16 %v2132
    %v2773 = vunpack.c.h.b16 %v2132
    %v2774 = vunpack.c.l.b16 %v2133
    %v2775 = vunpack.c.h.b16 %v2133
    %v2776 = vunpack.c.l.b16 %v2134
    %v2777 = vunpack.c.h.b16 %v2134
    %v2778 = vunpack.c.l.b16 %v2135
    %v2779 = vunpack.c.h.b16 %v2135
    %v2780 = vunpack.c.l.b16 %v2136
    %v2781 = vunpack.c.h.b16 %v2136
    %v2782 = vunpack.c.l.b16 %v2137
    %v2783 = vunpack.c.h.b16 %v2137
    %v2784 = vunpack.c.l.b16 %v2138
    %v2785 = vunpack.c.h.b16 %v2138
    %v2786 = vunpack.c.l.b16 %v2139
    %v2787 = vunpack.c.h.b16 %v2139
    %v2788 = vunpack.c.l.b16 %v2140
    %v2789 = vunpack.c.h.b16 %v2140
    %v2790 = vunpack.c.l.b16 %v2141
    %v2791 = vunpack.c.h.b16 %v2141
    %v2792 = vunpack.c.l.b16 %v2142
    %v2793 = vunpack.c.h.b16 %v2142
    %v2794 = vunpack.c.l.b16 %v2143
    %v2795 = vunpack.c.h.b16 %v2143
    %v2796 = vunpack.c.l.b16 %v2144
    %v2797 = vunpack.c.h.b16 %v2144
    %v2798 = vunpack.c.l.b16 %v2145
    %v2799 = vunpack.c.h.b16 %v2145
    %v2800 = vunpack.c.l.b16 %v2146
    %v2801 = vunpack.c.h.b16 %v2146
    %v2802 = vunpack.c.l.b16 %v2147
    %v2803 = vunpack.c.h.b16 %v2147
    %v2804 = vunpack.c.l.b16 %v2148
    %v2805 = vunpack.c.h.b16 %v2148
    %v2806 = vunpack.c.l.b16 %v2149
    %v2807 = vunpack.c.h.b16 %v2149
    %v2808 = vunpack.c.l.b16 %v2150
    %v2809 = vunpack.c.h.b16 %v2150
    %v2810 = vunpack.c.l.b16 %v2151
    %v2811 = vunpack.c.h.b16 %v2151
    %v2812 = vunpack.c.l.b16 %v2152
    %v2813 = vunpack.c.h.b16 %v2152
    %v2814 = vunpack.c.l.b16 %v2153
    %v2815 = vunpack.c.h.b16 %v2153
    %v2816 = vpack.c.b16 %v2690, %v2688
    %v2817 = vpack.c.b16 %v2691, %v2689
    %v2818 = vpack.c.b16 %v2694, %v2692
    %v2819 = vpack.c.b16 %v2695, %v2693
    %v2820 = vpack.c.b16 %v2698, %v2696
    %v2821 = vpack.c.b16 %v2699, %v2697
    %v2822 = vpack.c.b16 %v2702, %v2700
    %v2823 = vpack.c.b16 %v2703, %v2701
    %v2824 = vpack.c.b16 %v2706, %v2704
    %v2825 = vpack.c.b16 %v2707, %v2705
    %v2826 = vpack.c.b16 %v2710, %v2708
    %v2827 = vpack.c.b16 %v2711, %v2709
    %v2828 = vpack.c.b16 %v2714, %v2712
    %v2829 = vpack.c.b16 %v2715, %v2713
    %v2830 = vpack.c.b16 %v2718, %v2716
    %v2831 = vpack.c.b16 %v2719, %v2717
    %v2832 = vpack.c.b16 %v2722, %v2720
    %v2833 = vpack.c.b16 %v2723, %v2721
    %v2834 = vpack.c.b16 %v2726, %v2724
    %v2835 = vpack.c.b16 %v2727, %v2725
    %v2836 = vpack.c.b16 %v2730, %v2728
    %v2837 = vpack.c.b16 %v2731, %v2729
    %v2838 = vpack.c.b16 %v2734, %v2732
    %v2839 = vpack.c.b16 %v2735, %v2733
    %v2840 = vpack.c.b16 %v2738, %v2736
    %v2841 = vpack.c.b16 %v2739, %v2737
    %v2842 = vpack.c.b16 %v2742, %v2740
    %v2843 = vpack.c.b16 %v2743, %v2741
    %v2844 = vpack.c.b16 %v2746, %v2744
    %v2845 = vpack.c.b16 %v2747, %v2745
    %v2846 = vpack.c.b16 %v2750, %v2748
    %v2847 = vpack.c.b16 %v2751, %v2749
    %v2848 = vpack.c.b16 %v2754, %v2752
    %v2849 = vpack.c.b16 %v2755, %v2753
    %v2850 = vpack.c.b16 %v2758, %v2756
    %v2851 = vpack.c.b16 %v2759, %v2757
    %v2852 = vpack.c.b16 %v2762, %v2760
    %v2853 = vpack.c.b16 %v2763, %v2761
    %v2854 = vpack.c.b16 %v2766, %v2764
    %v2855 = vpack.c.b16 %v2767, %v2765
    %v2856 = vpack.c.b16 %v2770, %v2768
    %v2857 = vpack.c.b16 %v2771, %v2769
    %v2858 = vpack.c.b16 %v2774, %v2772
    %v2859 = vpack.c.b16 %v2775, %v2773
    %v2860 = vpack.c.b16 %v2778, %v2776
    %v2861 = vpack.c.b16 %v2779, %v2777
    %v2862 = vpack.c.b16 %v2782, %v2780
    %v2863 = vpack.c.b16 %v2783, %v2781
    %v2864 = vpack.c.b16 %v2786, %v2784
    %v2865 = vpack.c.b16 %v2787, %v2785
    %v2866 = vpack.c.b16 %v2790, %v2788
    %v2867 = vpack.c.b16 %v2791, %v2789
    %v2868 = vpack.c.b16 %v2794, %v2792
    %v2869 = vpack.c.b16 %v2795, %v2793
    %v2870 = vpack.c.b16 %v2798, %v2796
    %v2871 = vpack.c.b16 %v2799, %v2797
    %v2872 = vpack.c.b16 %v2802, %v2800
    %v2873 = vpack.c.b16 %v2803, %v2801
    %v2874 = vpack.c.b16 %v2806, %v2804
    %v2875 = vpack.c.b16 %v2807, %v2805
    %v2876 = vpack.c.b16 %v2810, %v2808
    %v2877 = vpack.c.b16 %v2811, %v2809
    %v2878 = vpack.c.b16 %v2814, %v2812
    %v2879 = vpack.c.b16 %v2815, %v2813
    %2944 = vmatprep.subr.bf16.mxu0 %v2817
    %2945 = vmatpush1.bf16.msra.mxu0 %v2816
    %2946 = vmatprep.subr.bf16.mxu0 %v2819
    %2947 = vmatpush1.bf16.msra.mxu0 %v2818
    %2948 = vmatprep.subr.bf16.mxu0 %v2821
    %2949 = vmatpush1.bf16.msra.mxu0 %v2820
    %2950 = vmatprep.subr.bf16.mxu0 %v2823
    %2951 = vmatpush1.bf16.msra.mxu0 %v2822
    %2952 = vmatprep.subr.bf16.mxu0 %v2825
    %2953 = vmatpush1.bf16.msra.mxu0 %v2824
    %2954 = vmatprep.subr.bf16.mxu0 %v2827
    %2955 = vmatpush1.bf16.msra.mxu0 %v2826
    %2956 = vmatprep.subr.bf16.mxu0 %v2829
    %2957 = vmatpush1.bf16.msra.mxu0 %v2828
    %2958 = vmatprep.subr.bf16.mxu0 %v2831
    %2959 = vmatpush1.bf16.msra.mxu0 %v2830
    %2960 = vmatprep.subr.bf16.mxu0 %v2833
    %2961 = vmatpush1.bf16.msra.mxu0 %v2832
    %2962 = vmatprep.subr.bf16.mxu0 %v2835
    %2963 = vmatpush1.bf16.msra.mxu0 %v2834
    %2964 = vmatprep.subr.bf16.mxu0 %v2837
    %2965 = vmatpush1.bf16.msra.mxu0 %v2836
    %2966 = vmatprep.subr.bf16.mxu0 %v2839
    %2967 = vmatpush1.bf16.msra.mxu0 %v2838
    %2968 = vmatprep.subr.bf16.mxu0 %v2841
    %2969 = vmatpush1.bf16.msra.mxu0 %v2840
    %2970 = vmatprep.subr.bf16.mxu0 %v2843
    %2971 = vmatpush1.bf16.msra.mxu0 %v2842
    %2972 = vmatprep.subr.bf16.mxu0 %v2845
    %2973 = vmatpush1.bf16.msra.mxu0 %v2844
    %2974 = vmatprep.subr.bf16.mxu0 %v2847
    %2975 = vmatpush1.bf16.msra.mxu0 %v2846
    %2976 = vmatprep.mubr.bf16.mxu0 %v1089
    %2977 = vmatmul.mubr.bf16.gmra.mrb[0].mxu0 %v1088
    %v2978 = vpop.f32.mrb[0].mxu0
    %v2979 = vadd.f32 %v2616, %v2978
    %v2980 = vpop.f32.mrb[0].mxu0
    %v2981 = vadd.f32 %v2618, %v2980
    %v2982 = vpop.f32.mrb[0].mxu0
    %v2983 = vadd.f32 %v2620, %v2982
    %v2984 = vpop.f32.mrb[0].mxu0
    %v2985 = vadd.f32 %v2622, %v2984
    %2986 = vdwg.mxu0
    %2987 = vmatprep.subr.bf16.mxu0 %v2849
    %2988 = vmatpush1.bf16.msra.mxu0 %v2848
    %2989 = vmatprep.subr.bf16.mxu0 %v2851
    %2990 = vmatpush1.bf16.msra.mxu0 %v2850
    %2991 = vmatprep.subr.bf16.mxu0 %v2853
    %2992 = vmatpush1.bf16.msra.mxu0 %v2852
    %2993 = vmatprep.subr.bf16.mxu0 %v2855
    %2994 = vmatpush1.bf16.msra.mxu0 %v2854
    %2995 = vmatprep.subr.bf16.mxu0 %v2857
    %2996 = vmatpush1.bf16.msra.mxu0 %v2856
    %2997 = vmatprep.subr.bf16.mxu0 %v2859
    %2998 = vmatpush1.bf16.msra.mxu0 %v2858
    %2999 = vmatprep.subr.bf16.mxu0 %v2861
    %3000 = vmatpush1.bf16.msra.mxu0 %v2860
    %3001 = vmatprep.subr.bf16.mxu0 %v2863
    %3002 = vmatpush1.bf16.msra.mxu0 %v2862
    %3003 = vmatprep.subr.bf16.mxu0 %v2865
    %3004 = vmatpush1.bf16.msra.mxu0 %v2864
    %3005 = vmatprep.subr.bf16.mxu0 %v2867
    %3006 = vmatpush1.bf16.msra.mxu0 %v2866
    %3007 = vmatprep.subr.bf16.mxu0 %v2869
    %3008 = vmatpush1.bf16.msra.mxu0 %v2868
    %3009 = vmatprep.subr.bf16.mxu0 %v2871
    %3010 = vmatpush1.bf16.msra.mxu0 %v2870
    %3011 = vmatprep.subr.bf16.mxu0 %v2873
    %3012 = vmatpush1.bf16.msra.mxu0 %v2872
    %3013 = vmatprep.subr.bf16.mxu0 %v2875
    %3014 = vmatpush1.bf16.msra.mxu0 %v2874
    %3015 = vmatprep.subr.bf16.mxu0 %v2877
    %3016 = vmatpush1.bf16.msra.mxu0 %v2876
    %3017 = vmatprep.subr.bf16.mxu0 %v2879
    %3018 = vmatpush1.bf16.msra.mxu0 %v2878
    %3019 = vmatprep.mubr.bf16.mxu0 %v1091
    %3020 = vmatmul.mubr.bf16.gmra.mrb[0].mxu0 %v1090
    %v3021 = vpop.f32.mrb[0].mxu0
    %v3022 = vadd.f32 %v2979, %v3021
    %v3023 = vpop.f32.mrb[0].mxu0
    %v3024 = vadd.f32 %v2981, %v3023
    %v3025 = vpop.f32.mrb[0].mxu0
    %v3026 = vadd.f32 %v2983, %v3025
    %v3027 = vpop.f32.mrb[0].mxu0
    %v3028 = vadd.f32 %v2985, %v3027
    %3029 = vdwg.mxu0
    %v3030 = vld [vmem:[%s8] sm:$0x3]
    %v3032 = vlaneseq
    %v3033 = vshrl.u32 %v3032, 7
    %v3034 = vsub.s32 0, %v3033
    %v3035 = vrot.slane %v3030, %v3034
    %v3036 = vlaneseq
    %v3037 = vshrl.u32 %v3036, 7
    %v3038 = vsub.s32 1, %v3037
    %v3039 = vrot.slane %v3030, %v3038
    %v3042 = vadd.f32 %v3022, %v3035
    %v3043 = vadd.f32 %v3024, %v3039
    %v3044 = vadd.f32 %v3026, %v3035
    %v3045 = vadd.f32 %v3028, %v3039
    %v3046 = vmax.f32 %v3042, 0.0
    %v3047 = vmax.f32 %v3043, 0.0
    %v3048 = vmax.f32 %v3044, 0.0
    %v3049 = vmax.f32 %v3045, 0.0
    %v3050 = vpack.c.bf16 %v3048, %v3046
    %v3051 = vpack.c.bf16 %v3049, %v3047
    %v3052 = vld [vmem:[%s9] sm:$0xf]
    %v3053 = vld [vmem:[%s9 + $0x4] sm:$0xf]
    %v3054 = vld [vmem:[%s9 + $0x8] sm:$0xf]
    %v3055 = vld [vmem:[%s9 + $0xc] sm:$0xf]
    %v3056 = vld [vmem:[%s9 + $0x10] sm:$0xf]
    %v3057 = vld [vmem:[%s9 + $0x14] sm:$0xf]
    %v3058 = vld [vmem:[%s9 + $0x18] sm:$0xf]
    %v3059 = vld [vmem:[%s9 + $0x1c] sm:$0xf]
    %v3060 = vld [vmem:[%s9 + $0x20] sm:$0xf]
    %v3061 = vld [vmem:[%s9 + $0x24] sm:$0xf]
    %v3062 = vld [vmem:[%s9 + $0x28] sm:$0xf]
    %v3063 = vld [vmem:[%s9 + $0x2c] sm:$0xf]
    %v3064 = vld [vmem:[%s9 + $0x30] sm:$0xf]
    %v3065 = vld [vmem:[%s9 + $0x34] sm:$0xf]
    %v3066 = vld [vmem:[%s9 + $0x38] sm:$0xf]
    %v3067 = vld [vmem:[%s9 + $0x3c] sm:$0xf]
    %v3068 = vld [vmem:[%s9 + $0x40] sm:$0xf]
    %v3069 = vld [vmem:[%s9 + $0x44] sm:$0xf]
    %v3070 = vld [vmem:[%s9 + $0x48] sm:$0xf]
    %v3071 = vld [vmem:[%s9 + $0x4c] sm:$0xf]
    %v3072 = vld [vmem:[%s9 + $0x50] sm:$0xf]
    %v3073 = vld [vmem:[%s9 + $0x54] sm:$0xf]
    %v3074 = vld [vmem:[%s9 + $0x58] sm:$0xf]
    %v3075 = vld [vmem:[%s9 + $0x5c] sm:$0xf]
    %v3076 = vld [vmem:[%s9 + $0x60] sm:$0xf]
    %v3077 = vld [vmem:[%s9 + $0x64] sm:$0xf]
    %v3078 = vld [vmem:[%s9 + $0x68] sm:$0xf]
    %v3079 = vld [vmem:[%s9 + $0x6c] sm:$0xf]
    %v3080 = vld [vmem:[%s9 + $0x70] sm:$0xf]
    %v3081 = vld [vmem:[%s9 + $0x74] sm:$0xf]
    %v3082 = vld [vmem:[%s9 + $0x78] sm:$0xf]
    %v3083 = vld [vmem:[%s9 + $0x7c] sm:$0xf]
    %v3084 = vld [vmem:[%s10] sm:$0x1]
    %v3086 = vlaneseq
    %v3087 = vshrl.u32 %v3086, 7
    %v3088 = vsub.s32 0, %v3087
    %v3089 = vrot.slane %v3084, %v3088
    %v3123 = vunpack.c.l.b16 %v3052
    %v3124 = vunpack.c.l.b16 %v3053
    %v3125 = vunpack.c.l.b16 %v3054
    %v3126 = vunpack.c.l.b16 %v3055
    %v3127 = vunpack.c.l.b16 %v3056
    %v3128 = vunpack.c.l.b16 %v3057
    %v3129 = vunpack.c.l.b16 %v3058
    %v3130 = vunpack.c.l.b16 %v3059
    %v3131 = vunpack.c.l.b16 %v3060
    %v3132 = vunpack.c.l.b16 %v3061
    %v3133 = vunpack.c.l.b16 %v3062
    %v3134 = vunpack.c.l.b16 %v3063
    %v3135 = vunpack.c.l.b16 %v3064
    %v3136 = vunpack.c.l.b16 %v3065
    %v3137 = vunpack.c.l.b16 %v3066
    %v3138 = vunpack.c.l.b16 %v3067
    %v3139 = vunpack.c.l.b16 %v3068
    %v3140 = vunpack.c.l.b16 %v3069
    %v3141 = vunpack.c.l.b16 %v3070
    %v3142 = vunpack.c.l.b16 %v3071
    %v3143 = vunpack.c.l.b16 %v3072
    %v3144 = vunpack.c.l.b16 %v3073
    %v3145 = vunpack.c.l.b16 %v3074
    %v3146 = vunpack.c.l.b16 %v3075
    %v3147 = vunpack.c.l.b16 %v3076
    %v3148 = vunpack.c.l.b16 %v3077
    %v3149 = vunpack.c.l.b16 %v3078
    %v3150 = vunpack.c.l.b16 %v3079
    %v3151 = vunpack.c.l.b16 %v3080
    %v3152 = vunpack.c.l.b16 %v3081
    %v3153 = vunpack.c.l.b16 %v3082
    %v3154 = vunpack.c.l.b16 %v3083
    %v3155 = vpack.c.b16 %v3124, %v3123
    %v3156 = vpack.c.b16 %v3126, %v3125
    %v3157 = vpack.c.b16 %v3128, %v3127
    %v3158 = vpack.c.b16 %v3130, %v3129
    %v3159 = vpack.c.b16 %v3132, %v3131
    %v3160 = vpack.c.b16 %v3134, %v3133
    %v3161 = vpack.c.b16 %v3136, %v3135
    %v3162 = vpack.c.b16 %v3138, %v3137
    %v3163 = vpack.c.b16 %v3140, %v3139
    %v3164 = vpack.c.b16 %v3142, %v3141
    %v3165 = vpack.c.b16 %v3144, %v3143
    %v3166 = vpack.c.b16 %v3146, %v3145
    %v3167 = vpack.c.b16 %v3148, %v3147
    %v3168 = vpack.c.b16 %v3150, %v3149
    %v3169 = vpack.c.b16 %v3152, %v3151
    %v3170 = vpack.c.b16 %v3154, %v3153
    %3187 = vmatprep.subr.bf16.mxu0 0
    %3188 = vmatpush1.bf16.msra.mxu0 %v3155
    %3189 = vmatprep.subr.bf16.mxu0 0
    %3190 = vmatpush1.bf16.msra.mxu0 %v3156
    %3191 = vmatprep.subr.bf16.mxu0 0
    %3192 = vmatpush1.bf16.msra.mxu0 %v3157
    %3193 = vmatprep.subr.bf16.mxu0 0
    %3194 = vmatpush1.bf16.msra.mxu0 %v3158
    %3195 = vmatprep.subr.bf16.mxu0 0
    %3196 = vmatpush1.bf16.msra.mxu0 %v3159
    %3197 = vmatprep.subr.bf16.mxu0 0
    %3198 = vmatpush1.bf16.msra.mxu0 %v3160
    %3199 = vmatprep.subr.bf16.mxu0 0
    %3200 = vmatpush1.bf16.msra.mxu0 %v3161
    %3201 = vmatprep.subr.bf16.mxu0 0
    %3202 = vmatpush1.bf16.msra.mxu0 %v3162
    %3203 = vmatprep.subr.bf16.mxu0 0
    %3204 = vmatpush1.bf16.msra.mxu0 %v3163
    %3205 = vmatprep.subr.bf16.mxu0 0
    %3206 = vmatpush1.bf16.msra.mxu0 %v3164
    %3207 = vmatprep.subr.bf16.mxu0 0
    %3208 = vmatpush1.bf16.msra.mxu0 %v3165
    %3209 = vmatprep.subr.bf16.mxu0 0
    %3210 = vmatpush1.bf16.msra.mxu0 %v3166
    %3211 = vmatprep.subr.bf16.mxu0 0
    %3212 = vmatpush1.bf16.msra.mxu0 %v3167
    %3213 = vmatprep.subr.bf16.mxu0 0
    %3214 = vmatpush1.bf16.msra.mxu0 %v3168
    %3215 = vmatprep.subr.bf16.mxu0 0
    %3216 = vmatpush1.bf16.msra.mxu0 %v3169
    %3217 = vmatprep.subr.bf16.mxu0 0
    %3218 = vmatpush1.bf16.msra.mxu0 %v3170
    %3219 = vmatprep.mubr.bf16.mxu0 %v3051
    %3220 = vmatmul.mubr.bf16.gmra.mrb[0].mxu0 %v3050
    %v3221 = vpop.f32.mrb[0].mxu0
    %v3222 = vadd.f32 %v3089, %v3221
    %v3223 = vpop.f32.mrb[0].mxu0
    %v3224 = vpop.f32.mrb[0].mxu0
    %v3225 = vadd.f32 %v3089, %v3224
    %v3226 = vpop.f32.mrb[0].mxu0
    %3227 = vdwg.mxu0
    %vm3228 = vcmask 64512
    %3229 = vst.msk [vmem:[%s11] sm:$0xff] %vm3228, %v3222
    %3230 = vst.msk [vmem:[%s11 + $0x8] sm:$0xff] %vm3228, %v3225
    // Predicated region
    $region62: #{tpu_custom_call.1} parent=1 // pred_check
      _
    $region63: #{tpu_custom_call.1} parent=1 // pred_check_branch
      %3232 = sbr.rel (0) target = $region65
    $region64: #{tpu_custom_call.1} parent=1 // pred_region
      _
    $region65: #{tpu_custom_call.1} parent=1 // pred_fallthru
      _
    // Predicated region
    $region66: #{tpu_custom_call.1} parent=1 // pred_check
      _
    $region67: #{tpu_custom_call.1} parent=1 // pred_check_branch
      %3234 = sbr.rel (0) target = $region69
    $region68: #{tpu_custom_call.1} parent=1 // pred_region
      _
    $region69: #{tpu_custom_call.1} parent=1 // pred_fallthru
      _
    %3235 = vsyncpa [#allocation3], 1
    %3236 = vsyncpa [#allocation5], 1
    %3237 = vsyncpa [#allocation8], 1

</llo_original>
